<compile_context>
chip_gen: v5e
topology: v5e:2x2
jax: 0.10.0
libtpu: 0.0.40
codegen_flags: <defaults>
</compile_context>

<pallas_src>
import math
from functools import partial

import jax
import jax.numpy as jnp
from jax.experimental import pallas as pl
from jax.experimental.pallas import tpu as pltpu

_GN_EPS = 1e-5                      # PyTorch nn.GroupNorm default
_COMPUTE_DTYPE = jnp.bfloat16       # MXU inputs / intermediate activations
_VMEM_LIMIT = 48 * 1024 * 1024      # explicit scoped-VMEM budget (v7x-safe)
_SMALL_CK = 16                      # contraction below this -> VPU MAC path


def _gelu_exact(x):
    # PyTorch nn.GELU() default: exact erf-based GELU (fp32 math in-kernel).
    return 0.5 * x * (1.0 + jax.lax.erf(x * (1.0 / math.sqrt(2.0))))


def _conv_tile(p, w):
    """(T, CK) @ (CK, Cout) with fp32 accumulation.

    Tiny contractions (layer 0: Cin=1, K<=10) would waste >90% of the MXU, so
    they run as K broadcast multiply-accumulates on the VPU instead.
    """
    ck = p.shape[-1]
    if ck < _SMALL_CK:
        pf = p.astype(jnp.float32)
        wf = w.astype(jnp.float32)
        acc = pf[:, 0:1] * wf[0:1, :]
        for j in range(1, ck):
            acc = acc + pf[:, j:j + 1] * wf[j:j + 1, :]
        return acc
    return jnp.dot(p, w, preferred_element_type=jnp.float32)


# --------------------------- kernels ---------------------------------------

def _conv_gelu_kernel(p_ref, w_ref, o_ref):
    # p: (1, T_TILE, CK), w: (CK, Cout), o: (1, T_TILE, Cout)
    y = _conv_tile(p_ref[0], w_ref[...])
    o_ref[0] = _gelu_exact(y).astype(o_ref.dtype)


def _conv_stats_kernel(p_ref, w_ref, sum_ref, sq_ref, *, t_tile, t_out):
    # GroupNorm pass 1: accumulate per-channel sum / sum-of-squares of the
    # pre-norm conv output across time tiles (output-resident accumulators).
    t = pl.program_id(1)

    @pl.when(t == 0)
    def _():
        sum_ref[...] = jnp.zeros_like(sum_ref)
        sq_ref[...] = jnp.zeros_like(sq_ref)

    y = _conv_tile(p_ref[0], w_ref[...])                      # (T_TILE, Cout) fp32
    row = jax.lax.broadcasted_iota(jnp.int32, (t_tile, 1), 0) + t * t_tile
    y = jnp.where(row < t_out, y, 0.0)                        # mask ragged tail tile
    sum_ref[...] = sum_ref[...] + jnp.sum(y, axis=0, keepdims=True)[None]
    sq_ref[...] = sq_ref[...] + jnp.sum(y * y, axis=0, keepdims=True)[None]


def _conv_norm_gelu_kernel(p_ref, w_ref, a_ref, s_ref, o_ref):
    # GroupNorm pass 2: recompute the (cheap) conv tile, apply the folded
    # per-(batch, channel) scale/shift, exact GELU, store.
    y = _conv_tile(p_ref[0], w_ref[...])
    y = y * a_ref[0] + s_ref[0]
    o_ref[0] = _gelu_exact(y).astype(o_ref.dtype)


# --------------------------- wrappers ---------------------------------------

def _im2col_nlc(x, k, stride):
    """x: (B, Tin, Cin) -> patches (B, Tout, K*Cin), tap-major ordering.

    stride == k is a zero-copy reshape; otherwise K strided time-slices
    stacked along a new tap axis (no large transpose)."""
    b, t_in, c_in = x.shape
    t_out = (t_in - k) // stride + 1
    if stride == k:
        return x[:, :t_out * k, :].reshape(b, t_out, k * c_in), t_out
    taps = [x[:, j:j + stride * (t_out - 1) + 1:stride, :] for j in range(k)]
    return jnp.stack(taps, axis=2).reshape(b, t_out, k * c_in), t_out


def conv_block_pallas(x, w, stride, gamma=None, beta=None, group_norm=False,
                      t_tile=512):
    """One block: Conv1d(bias=False) [+ fp32 GroupNorm(dim, dim)] + GELU.

    x: (B, Tin, Cin) time-major.  w: (Cout, Cin, K).  Returns (B, Tout, Cout)
    in the compute dtype (bf16)."""
    B, Tin, Cin = x.shape
    Cout, _, K = w.shape
    patches, Tout = _im2col_nlc(x.astype(_COMPUTE_DTYPE), K, stride)
    CK = K * Cin
    # w2[j*Cin + c, o] = w[o, c, j]  (matches the tap-major patch layout)
    w2 = jnp.transpose(w, (2, 1, 0)).reshape(CK, Cout).astype(_COMPUTE_DTYPE)

    tt = Tout if Tout <= t_tile else t_tile
    nt = (Tout + tt - 1) // tt

    w_spec = pl.BlockSpec((CK, Cout), lambda b, t: (0, 0))
    p_spec = pl.BlockSpec((1, tt, CK), lambda b, t: (b, t, 0))
    o_spec = pl.BlockSpec((1, tt, Cout), lambda b, t: (b, t, 0))
    par_params = pltpu.CompilerParams(
        dimension_semantics=("parallel", "parallel"),
        vmem_limit_bytes=_VMEM_LIMIT)

    if not group_norm:
        return pl.pallas_call(
            _conv_gelu_kernel,
            out_shape=jax.ShapeDtypeStruct((B, Tout, Cout), _COMPUTE_DTYPE),
            grid=(B, nt),
            in_specs=[p_spec, w_spec],
            out_specs=o_spec,
            compiler_params=par_params,
        )(patches, w2)

    # ---- GroupNorm layer: pass 1 (statistics over the full time axis) ------
    stat_spec = pl.BlockSpec((1, 1, Cout), lambda b, t: (b, 0, 0))
    sums, sqs = pl.pallas_call(
        partial(_conv_stats_kernel, t_tile=tt, t_out=Tout),
        out_shape=(jax.ShapeDtypeStruct((B, 1, Cout), jnp.float32),
                   jax.ShapeDtypeStruct((B, 1, Cout), jnp.float32)),
        grid=(B, nt),
        in_specs=[p_spec, w_spec],
        out_specs=(stat_spec, stat_spec),
        compiler_params=pltpu.CompilerParams(
            dimension_semantics=("parallel", "arbitrary"),
            vmem_limit_bytes=_VMEM_LIMIT),
    )(patches, w2)

    # Tiny finish in plain JAX: biased variance over time, folded affine.
    mean = sums[:, 0, :] / Tout                                  # (B, Cout)
    var = jnp.maximum(sqs[:, 0, :] / Tout - mean * mean, 0.0)
    rstd = jax.lax.rsqrt(var + _GN_EPS)
    scale = rstd * gamma[None, :].astype(jnp.float32)            # (B, Cout)
    shift = beta[None, :].astype(jnp.float32) - mean * scale
    scale3 = scale[:, None, :]                                   # (B, 1, Cout)
    shift3 = shift[:, None, :]

    # ---- pass 2: recompute conv tile, normalize + affine + GELU ------------
    ab_spec = pl.BlockSpec((1, 1, Cout), lambda b, t: (b, 0, 0))
    return pl.pallas_call(
        _conv_norm_gelu_kernel,
        out_shape=jax.ShapeDtypeStruct((B, Tout, Cout), _COMPUTE_DTYPE),
        grid=(B, nt),
        in_specs=[p_spec, w_spec, ab_spec, ab_spec],
        out_specs=o_spec,
        compiler_params=par_params,
    )(patches, w2, scale3, shift3)


def conv_feature_extraction_forward(x, params, t_tile=512):
    """x: (B, T) fp32.  Returns (B, C, T_out) fp32 (PyTorch layout)."""
    y = x[:, :, None]                      # unsqueeze(1) equivalent, time-major
    for p in params:
        y = conv_block_pallas(
            y, p["w"], p["stride"],
            gamma=p.get("gamma"), beta=p.get("beta"),
            group_norm=p["group_norm"], t_tile=t_tile)
    return jnp.transpose(y, (0, 2, 1)).astype(jnp.float32)


def init_params(conv_layers, key, mode="default"):
    """Deterministic parameter init matching the PyTorch module (conv_bias=False)."""
    params = []
    in_d = 1
    for i, (dim, k, stride) in enumerate(conv_layers):
        key, sub = jax.random.split(key)
        std = math.sqrt(2.0 / (in_d * k))   # kaiming_normal_, fan_in, gain=sqrt(2)
        w = jax.random.normal(sub, (dim, in_d, k), dtype=jnp.float32) * std
        layer = {"w": w, "stride": stride,
                 "group_norm": (mode == "default" and i == 0)}
        if layer["group_norm"]:
            layer["gamma"] = jnp.ones((dim,), jnp.float32)
            layer["beta"] = jnp.zeros((dim,), jnp.float32)
        params.append(layer)
        in_d = dim
    return params


def reference_forward(x, params):
    """Pure fp32 JAX reference (PyTorch-parity) for the correctness check."""
    y = x[:, None, :]
    for p in params:
        y = jax.lax.conv_general_dilated(
            y, p["w"], (p["stride"],), "VALID",
            dimension_numbers=("NCH", "OIH", "NCH"))
        if p["group_norm"]:
            mean = y.mean(-1, keepdims=True)
            var = ((y - mean) ** 2).mean(-1, keepdims=True)
            y = (y - mean) / jnp.sqrt(var + _GN_EPS)
            y = y * p["gamma"][None, :, None] + p["beta"][None, :, None]
        y = _gelu_exact(y)
    return y


if __name__ == "__main__":
    # Small wav2vec2-style config: (dim, kernel, stride); mode='default',
    # conv_bias=False.  Layer 0 gets the fp32 GroupNorm + VPU conv path,
    # layer 1 exercises the strided-slice im2col + MXU path, layer 2 the
    # zero-copy stride==K path.
    conv_layers = [(64, 10, 5), (64, 3, 2), (64, 2, 2)]
    key = jax.random.PRNGKey(0)
    key, xk = jax.random.split(key)

    B, T = 2, 2048
    x = jax.random.normal(xk, (B, T), dtype=jnp.float32)
    params = init_params(conv_layers, key, mode="default")

    # t_tile=128 so the small test still exercises multi-tile grids and the
    # ragged final time tile (production default is 512).
    out = jax.block_until_ready(
        conv_feature_extraction_forward(x, params, t_tile=128))
    ref = jax.block_until_ready(reference_forward(x, params))

    assert out.shape == ref.shape, (out.shape, ref.shape)
    # bf16 MXU inputs / bf16 intermediate activations (fp32 accumulation and
    # fp32 GroupNorm/GELU math) => compare to the fp32 reference with a
    # correspondingly loose tolerance.
    max_err = float(jnp.max(jnp.abs(out - ref)))
    assert jnp.allclose(out, ref, rtol=5e-2, atol=5e-2), max_err
    print("KERNEL_OK")
</pallas_src>

<mosaic_0001>
module attributes {stable_mosaic.version = 11 : i64} {
  func.func @_conv_stats_kernel(%arg0: i32, %arg1: i32, %arg2: memref<1x128x10xbf16, #tpu.memory_space<vmem>>, %arg3: memref<10x64xbf16, #tpu.memory_space<vmem>>, %arg4: memref<1x1x64xf32, #tpu.memory_space<vmem>>, %arg5: memref<1x1x64xf32, #tpu.memory_space<vmem>>) attributes {dimension_semantics = [#tpu.dimension_semantics<parallel>, #tpu.dimension_semantics<arbitrary>], iteration_bounds = array<i64: 2, 4>, scalar_prefetch = 0 : i64, scratch_operands = 0 : i64, tpu.core_type = #tpu.core_type<tc>, window_params = [{transform_indices = @transform_0, window_bounds = array<i64: 1, 128, 10>}, {pipeline_mode = #tpu.pipeline_mode<synchronous>, transform_indices = @transform_1, window_bounds = array<i64: 10, 64>}, {transform_indices = @transform_2, window_bounds = array<i64: 1, 1, 64>}, {transform_indices = @transform_3, window_bounds = array<i64: 1, 1, 64>}]} {
    %c0_i32 = arith.constant 0 : i32
    %0 = arith.cmpi eq, %arg1, %c0_i32 : i32
    %1 = arith.extui %0 : i1 to i32
    %c0_i32_0 = arith.constant 0 : i32
    %2 = arith.cmpi ne, %1, %c0_i32_0 : i32
    scf.if %2 {
      %cst_19 = arith.constant 0.000000e+00 : f32
      %90 = vector.broadcast %cst_19 : f32 to vector<1x1x64xf32>
      %c0_20 = arith.constant 0 : index
      %c0_21 = arith.constant 0 : index
      %c0_22 = arith.constant 0 : index
      %91 = vector.load %arg4[%c0_20, %c0_21, %c0_22] : memref<1x1x64xf32, #tpu.memory_space<vmem>>, vector<1x1x64xf32>
      tpu.vector_store %arg4[%c0_20, %c0_21, %c0_22], %90 {strides = array<i32>} : memref<1x1x64xf32, #tpu.memory_space<vmem>>, vector<1x1x64xf32>,
      %cst_23 = arith.constant 0.000000e+00 : f32
      %92 = vector.broadcast %cst_23 : f32 to vector<1x1x64xf32>
      %c0_24 = arith.constant 0 : index
      %c0_25 = arith.constant 0 : index
      %c0_26 = arith.constant 0 : index
      %93 = vector.load %arg5[%c0_24, %c0_25, %c0_26] : memref<1x1x64xf32, #tpu.memory_space<vmem>>, vector<1x1x64xf32>
      tpu.vector_store %arg5[%c0_24, %c0_25, %c0_26], %92 {strides = array<i32>} : memref<1x1x64xf32, #tpu.memory_space<vmem>>, vector<1x1x64xf32>,
    } else {
    }
    %c0 = arith.constant 0 : index
    %c0_1 = arith.constant 0 : index
    %c0_2 = arith.constant 0 : index
    %3 = vector.load %arg2[%c0, %c0_1, %c0_2] : memref<1x128x10xbf16, #tpu.memory_space<vmem>>, vector<1x128x10xbf16>
    %4 = vector.shape_cast %3 : vector<1x128x10xbf16> to vector<128x10xbf16>
    %c0_3 = arith.constant 0 : index
    %c0_4 = arith.constant 0 : index
    %5 = vector.load %arg3[%c0_3, %c0_4] : memref<10x64xbf16, #tpu.memory_space<vmem>>, vector<10x64xbf16>
    %6 = arith.extf %4 : vector<128x10xbf16> to vector<128x10xf32>
    %7 = arith.extf %5 : vector<10x64xbf16> to vector<10x64xf32>
    %8 = vector.extract_strided_slice %6 {offsets = [0, 0], sizes = [128, 1], strides = [1, 1]} : vector<128x10xf32> to vector<128x1xf32>
    %9 = vector.extract_strided_slice %7 {offsets = [0, 0], sizes = [1, 64], strides = [1, 1]} : vector<10x64xf32> to vector<1x64xf32>
    %10 = vector.broadcast %8 : vector<128x1xf32> to vector<128x64xf32>
    %11 = vector.broadcast %9 : vector<1x64xf32> to vector<128x64xf32>
    %12 = arith.mulf %10, %11 : vector<128x64xf32>
    %13 = vector.extract_strided_slice %6 {offsets = [0, 1], sizes = [128, 1], strides = [1, 1]} : vector<128x10xf32> to vector<128x1xf32>
    %14 = vector.extract_strided_slice %7 {offsets = [1, 0], sizes = [1, 64], strides = [1, 1]} : vector<10x64xf32> to vector<1x64xf32>
    %15 = vector.broadcast %13 : vector<128x1xf32> to vector<128x64xf32>
    %16 = vector.broadcast %14 : vector<1x64xf32> to vector<128x64xf32>
    %17 = arith.mulf %15, %16 : vector<128x64xf32>
    %18 = arith.addf %12, %17 : vector<128x64xf32>
    %19 = vector.extract_strided_slice %6 {offsets = [0, 2], sizes = [128, 1], strides = [1, 1]} : vector<128x10xf32> to vector<128x1xf32>
    %20 = vector.extract_strided_slice %7 {offsets = [2, 0], sizes = [1, 64], strides = [1, 1]} : vector<10x64xf32> to vector<1x64xf32>
    %21 = vector.broadcast %19 : vector<128x1xf32> to vector<128x64xf32>
    %22 = vector.broadcast %20 : vector<1x64xf32> to vector<128x64xf32>
    %23 = arith.mulf %21, %22 : vector<128x64xf32>
    %24 = arith.addf %18, %23 : vector<128x64xf32>
    %25 = vector.extract_strided_slice %6 {offsets = [0, 3], sizes = [128, 1], strides = [1, 1]} : vector<128x10xf32> to vector<128x1xf32>
    %26 = vector.extract_strided_slice %7 {offsets = [3, 0], sizes = [1, 64], strides = [1, 1]} : vector<10x64xf32> to vector<1x64xf32>
    %27 = vector.broadcast %25 : vector<128x1xf32> to vector<128x64xf32>
    %28 = vector.broadcast %26 : vector<1x64xf32> to vector<128x64xf32>
    %29 = arith.mulf %27, %28 : vector<128x64xf32>
    %30 = arith.addf %24, %29 : vector<128x64xf32>
    %31 = vector.extract_strided_slice %6 {offsets = [0, 4], sizes = [128, 1], strides = [1, 1]} : vector<128x10xf32> to vector<128x1xf32>
    %32 = vector.extract_strided_slice %7 {offsets = [4, 0], sizes = [1, 64], strides = [1, 1]} : vector<10x64xf32> to vector<1x64xf32>
    %33 = vector.broadcast %31 : vector<128x1xf32> to vector<128x64xf32>
    %34 = vector.broadcast %32 : vector<1x64xf32> to vector<128x64xf32>
    %35 = arith.mulf %33, %34 : vector<128x64xf32>
    %36 = arith.addf %30, %35 : vector<128x64xf32>
    %37 = vector.extract_strided_slice %6 {offsets = [0, 5], sizes = [128, 1], strides = [1, 1]} : vector<128x10xf32> to vector<128x1xf32>
    %38 = vector.extract_strided_slice %7 {offsets = [5, 0], sizes = [1, 64], strides = [1, 1]} : vector<10x64xf32> to vector<1x64xf32>
    %39 = vector.broadcast %37 : vector<128x1xf32> to vector<128x64xf32>
    %40 = vector.broadcast %38 : vector<1x64xf32> to vector<128x64xf32>
    %41 = arith.mulf %39, %40 : vector<128x64xf32>
    %42 = arith.addf %36, %41 : vector<128x64xf32>
    %43 = vector.extract_strided_slice %6 {offsets = [0, 6], sizes = [128, 1], strides = [1, 1]} : vector<128x10xf32> to vector<128x1xf32>
    %44 = vector.extract_strided_slice %7 {offsets = [6, 0], sizes = [1, 64], strides = [1, 1]} : vector<10x64xf32> to vector<1x64xf32>
    %45 = vector.broadcast %43 : vector<128x1xf32> to vector<128x64xf32>
    %46 = vector.broadcast %44 : vector<1x64xf32> to vector<128x64xf32>
    %47 = arith.mulf %45, %46 : vector<128x64xf32>
    %48 = arith.addf %42, %47 : vector<128x64xf32>
    %49 = vector.extract_strided_slice %6 {offsets = [0, 7], sizes = [128, 1], strides = [1, 1]} : vector<128x10xf32> to vector<128x1xf32>
    %50 = vector.extract_strided_slice %7 {offsets = [7, 0], sizes = [1, 64], strides = [1, 1]} : vector<10x64xf32> to vector<1x64xf32>
    %51 = vector.broadcast %49 : vector<128x1xf32> to vector<128x64xf32>
    %52 = vector.broadcast %50 : vector<1x64xf32> to vector<128x64xf32>
    %53 = arith.mulf %51, %52 : vector<128x64xf32>
    %54 = arith.addf %48, %53 : vector<128x64xf32>
    %55 = vector.extract_strided_slice %6 {offsets = [0, 8], sizes = [128, 1], strides = [1, 1]} : vector<128x10xf32> to vector<128x1xf32>
    %56 = vector.extract_strided_slice %7 {offsets = [8, 0], sizes = [1, 64], strides = [1, 1]} : vector<10x64xf32> to vector<1x64xf32>
    %57 = vector.broadcast %55 : vector<128x1xf32> to vector<128x64xf32>
    %58 = vector.broadcast %56 : vector<1x64xf32> to vector<128x64xf32>
    %59 = arith.mulf %57, %58 : vector<128x64xf32>
    %60 = arith.addf %54, %59 : vector<128x64xf32>
    %61 = vector.extract_strided_slice %6 {offsets = [0, 9], sizes = [128, 1], strides = [1, 1]} : vector<128x10xf32> to vector<128x1xf32>
    %62 = vector.extract_strided_slice %7 {offsets = [9, 0], sizes = [1, 64], strides = [1, 1]} : vector<10x64xf32> to vector<1x64xf32>
    %63 = vector.broadcast %61 : vector<128x1xf32> to vector<128x64xf32>
    %64 = vector.broadcast %62 : vector<1x64xf32> to vector<128x64xf32>
    %65 = arith.mulf %63, %64 : vector<128x64xf32>
    %66 = arith.addf %60, %65 : vector<128x64xf32>
    %67 = tpu.iota {dimensions = array<i32: 0>} : vector<128x1xi32>
    %c128_i32 = arith.constant 128 : i32
    %68 = arith.muli %arg1, %c128_i32 : i32
    %69 = vector.broadcast %68 : i32 to vector<128x1xi32>
    %70 = arith.addi %67, %69 : vector<128x1xi32>
    %c408_i32 = arith.constant 408 : i32
    %71 = vector.broadcast %c408_i32 : i32 to vector<128x1xi32>
    %72 = arith.cmpi slt, %70, %71 : vector<128x1xi32>
    %cst = arith.constant 0.000000e+00 : f32
    %73 = vector.shape_cast %72 : vector<128x1xi1> to vector<128x1xi1>
    %74 = vector.broadcast %73 : vector<128x1xi1> to vector<128x64xi1>
    %75 = vector.broadcast %cst : f32 to vector<128x64xf32>
    %76 = arith.select %74, %66, %75 : vector<128x64xi1>, vector<128x64xf32>
    %c0_5 = arith.constant 0 : index
    %c0_6 = arith.constant 0 : index
    %c0_7 = arith.constant 0 : index
    %77 = vector.load %arg4[%c0_5, %c0_6, %c0_7] : memref<1x1x64xf32, #tpu.memory_space<vmem>>, vector<1x1x64xf32>
    %cst_8 = arith.constant dense<0.000000e+00> : vector<64xf32>
    %78 = vector.multi_reduction <add>, %76, %cst_8 [0] : vector<128x64xf32> to vector<64xf32>
    %79 = vector.shape_cast %78 : vector<64xf32> to vector<1x64xf32>
    %80 = vector.shape_cast %79 : vector<1x64xf32> to vector<1x1x64xf32>
    %81 = arith.addf %77, %80 : vector<1x1x64xf32>
    %c0_9 = arith.constant 0 : index
    %c0_10 = arith.constant 0 : index
    %c0_11 = arith.constant 0 : index
    %82 = vector.load %arg4[%c0_9, %c0_10, %c0_11] : memref<1x1x64xf32, #tpu.memory_space<vmem>>, vector<1x1x64xf32>
    tpu.vector_store %arg4[%c0_9, %c0_10, %c0_11], %81 {strides = array<i32>} : memref<1x1x64xf32, #tpu.memory_space<vmem>>, vector<1x1x64xf32>,
    %c0_12 = arith.constant 0 : index
    %c0_13 = arith.constant 0 : index
    %c0_14 = arith.constant 0 : index
    %83 = vector.load %arg5[%c0_12, %c0_13, %c0_14] : memref<1x1x64xf32, #tpu.memory_space<vmem>>, vector<1x1x64xf32>
    %84 = arith.mulf %76, %76 : vector<128x64xf32>
    %cst_15 = arith.constant dense<0.000000e+00> : vector<64xf32>
    %85 = vector.multi_reduction <add>, %84, %cst_15 [0] : vector<128x64xf32> to vector<64xf32>
    %86 = vector.shape_cast %85 : vector<64xf32> to vector<1x64xf32>
    %87 = vector.shape_cast %86 : vector<1x64xf32> to vector<1x1x64xf32>
    %88 = arith.addf %83, %87 : vector<1x1x64xf32>
    %c0_16 = arith.constant 0 : index
    %c0_17 = arith.constant 0 : index
    %c0_18 = arith.constant 0 : index
    %89 = vector.load %arg5[%c0_16, %c0_17, %c0_18] : memref<1x1x64xf32, #tpu.memory_space<vmem>>, vector<1x1x64xf32>
    tpu.vector_store %arg5[%c0_16, %c0_17, %c0_18], %88 {strides = array<i32>} : memref<1x1x64xf32, #tpu.memory_space<vmem>>, vector<1x1x64xf32>,
    return
  }
  func.func @transform_0(%arg0: i32, %arg1: i32) -> (i32, i32, i32) {
    %c0_i32 = arith.constant 0 : i32
    %c0_i32_0 = arith.constant 0 : i32
    return %arg0, %arg1, %c0_i32 : i32, i32, i32
  }
  func.func @transform_1(%arg0: i32, %arg1: i32) -> (i32, i32) {
    %c0_i32 = arith.constant 0 : i32
    %c0_i32_0 = arith.constant 0 : i32
    %c0_i32_1 = arith.constant 0 : i32
    return %c0_i32, %c0_i32_0 : i32, i32
  }
  func.func @transform_2(%arg0: i32, %arg1: i32) -> (i32, i32, i32) {
    %c0_i32 = arith.constant 0 : i32
    %c0_i32_0 = arith.constant 0 : i32
    %c0_i32_1 = arith.constant 0 : i32
    return %arg0, %c0_i32, %c0_i32_0 : i32, i32, i32
  }
  func.func @transform_3(%arg0: i32, %arg1: i32) -> (i32, i32, i32) {
    %c0_i32 = arith.constant 0 : i32
    %c0_i32_0 = arith.constant 0 : i32
    %c0_i32_1 = arith.constant 0 : i32
    return %arg0, %c0_i32, %c0_i32_0 : i32, i32, i32
  }
}

</mosaic_0001>

<llo_original>
// kernel: tpu_custom_call.1
$region0: #{tpu_custom_call.1}
  #allocation0 [shape = 'u32[]', space=smem, size = 0x4, offset = 0x4, fixed_abs, tag = 'smem constant byte address 0x4 - core index']
  #allocation1 [shape = 'u32[72,128]{1,0:T(1,128)}', space=vmem, size = 0x9000, scoped, tag = 'internal scratch']
  %s0 = inlined_call_operand.vmem [shape: bf16[2,408,10], index: 0, kind: input, shape index: {}]
  %s1 = inlined_call_operand.vmem [shape: bf16[10,64], index: 1, kind: input, shape index: {}]
  %s2 = inlined_call_operand.hbm [shape: f32[2,1,64], index: 2, kind: output, shape index: {0}]
  %s3 = inlined_call_operand.hbm [shape: f32[2,1,64], index: 3, kind: output, shape index: {1}]
  %4 = xla_tuple %s2, %s3
  %s5 = sld [smem:[#allocation0]]
  $region53: #{tpu_custom_call.1} parent=0
    _
  %s7 = ssub.s32 1, %s5
  %s8 = scalar_select 0, %s7, %s5
  $region1: #{tpu_custom_call.1} parent=0
    #allocation2 [shape = 'u8[1024]{0}', space=vmem, size = 0x400, scoped, tag = 'output window, operand 0']
    #allocation3 [shape = 's32[2]{0}', space=sflag, size = 0x8, scoped, tag = 'scoped memory for tpu_custom_call.1']
    #allocation4 [shape = 'u8[1024]{0}', space=vmem, size = 0x400, scoped, tag = 'output window, operand 1']
    #allocation5 [shape = 's32[2]{0}', space=sflag, size = 0x8, scoped, tag = 'scoped memory for tpu_custom_call.1']
    %9 = vsyncpa [#allocation3], 0
    %s10 = scalar_lea.sflag [#allocation3], 1
    %11 = vsyncpa %s10, 0
    %12 = vsyncpa [#allocation5], 0
    %s13 = scalar_lea.sflag [#allocation5], 1
    %14 = vsyncpa %s13, 0
    loop: start=0, step=1, limit=10
    $region2: #{tpu_custom_call.1} parent=1 // loop_pre_header
      _
    $region3: #{tpu_custom_call.1} parent=1 // loop_header
      %s16 = sphi 0, %s20
      %p17 = scmp.ge.s32.totalorder %s16, 10
      %s23 = sphi 0, %s35
      %s24 = sphi 0, %s31
      %s25 = sphi 0, %s23
      %s26 = sphi 0, %s24
      %s27 = sphi 0, %s25
      %s28 = sphi 0, %s26
      %s40 = sphi 0, %s42
      %s43 = sphi 0, %s40
      %s44 = sphi 0, %s43
      %s60 = sphi 0, %s44
      %s64 = sphi 0, %s64
      %s66 = sphi 0, %s64
      %s67 = sphi 0, %s66
      %s81 = sphi 0, %s67
      %s87 = sphi 0, %s89
      %s90 = sphi 0, %s87
      %s91 = sphi 0, %s90
      %s107 = sphi 0, %s91
      %s113 = sphi 0, %s115
      %s116 = sphi 0, %s113
      %s117 = sphi 0, %s116
      %s133 = sphi 0, %s117
    $region4: #{tpu_custom_call.1} parent=1 // loop_header_branch
      %19 = sbr.rel (%p17) target = $region8
    $region5: #{tpu_custom_call.1} parent=1 // loop_body
      %s21 = ssub.s32 %s16, 1
      %s22 = ssub.s32 %s16, 2
      %s29 = sadd.s32 1, %s24
      %p30 = scmp.ge.s32.totalorder %s29, 4
      %s31 = scalar_select %p30, 0, %s29
      %s32 = sadd.s32 1, %s23
      %s33 = scalar_select %p30, %s32, %s23
      %p34 = scmp.ge.s32.totalorder %s33, 2
      %s35 = scalar_select %p34, 0, %s33
      %s36 = ssub.s32 %s23, %s35
      %s37 = ssub.s32 %s24, %s31
      %s38 = sor.u32 %s36, %s37
      %p39 = scmp.eq.s32.totalorder %s38, 0
      %s41 = sadd.s32 %s40, 1
      %s42 = scalar_select %p39, %s40, %s41
      %p45 = pneg %p39
      %p46 = scmp.eq.s32.totalorder %s16, 7
      %p47 = por %p45, %p46
      %p48 = scmp.ne.s32.totalorder %s40, %s43
      %p49 = scmp.eq.s32.totalorder %s16, 0
      %p50 = por %p48, %p49
      %p51 = scmp.ne.s32.totalorder %s40, %s43
      %p52 = scmp.eq.s32.totalorder %s21, 7
      %p53 = por %p51, %p52
      %p54 = scmp.ne.s32.totalorder %s43, %s44
      %p55 = scmp.eq.s32.totalorder %s21, 0
      %p56 = por %p54, %p55
      %p57 = scmp.ne.s32.totalorder %s43, %s44
      %p58 = scmp.eq.s32.totalorder %s22, 7
      %p59 = por %p57, %p58
      %p61 = scmp.ne.s32.totalorder %s44, %s60
      %p62 = scmp.eq.s32.totalorder %s22, 0
      %p63 = por %p61, %p62
      %s65 = sadd.s32 %s64, 1
      %p68 = scmp.eq.s32.totalorder %s16, 7
      %p69 = scmp.ne.s32.totalorder %s64, %s66
      %p70 = scmp.eq.s32.totalorder %s16, 0
      %p71 = por %p69, %p70
      %p72 = scmp.ne.s32.totalorder %s64, %s66
      %p73 = scmp.eq.s32.totalorder %s21, 7
      %p74 = por %p72, %p73
      %p75 = scmp.ne.s32.totalorder %s66, %s67
      %p76 = scmp.eq.s32.totalorder %s21, 0
      %p77 = por %p75, %p76
      %p78 = scmp.ne.s32.totalorder %s66, %s67
      %p79 = scmp.eq.s32.totalorder %s22, 7
      %p80 = por %p78, %p79
      %p82 = scmp.ne.s32.totalorder %s67, %s81
      %p83 = scmp.eq.s32.totalorder %s22, 0
      %p84 = por %p82, %p83
      %s85 = ssub.s32 %s23, %s35
      %p86 = scmp.eq.s32.totalorder %s85, 0
      %s88 = sadd.s32 %s87, 1
      %s89 = scalar_select %p86, %s87, %s88
      %p92 = pneg %p86
      %p93 = scmp.eq.s32.totalorder %s16, 7
      %p94 = por %p92, %p93
      %p95 = scmp.ne.s32.totalorder %s87, %s90
      %p96 = scmp.eq.s32.totalorder %s16, 0
      %p97 = por %p95, %p96
      %p98 = scmp.ne.s32.totalorder %s87, %s90
      %p99 = scmp.eq.s32.totalorder %s21, 7
      %p100 = por %p98, %p99
      %p101 = scmp.ne.s32.totalorder %s90, %s91
      %p102 = scmp.eq.s32.totalorder %s21, 0
      %p103 = por %p101, %p102
      %p104 = scmp.ne.s32.totalorder %s90, %s91
      %p105 = scmp.eq.s32.totalorder %s22, 7
      %p106 = por %p104, %p105
      %p108 = scmp.ne.s32.totalorder %s91, %s107
      %p109 = scmp.eq.s32.totalorder %s22, 0
      %p110 = por %p108, %p109
      %s111 = ssub.s32 %s23, %s35
      %p112 = scmp.eq.s32.totalorder %s111, 0
      %s114 = sadd.s32 %s113, 1
      %s115 = scalar_select %p112, %s113, %s114
      %p118 = pneg %p112
      %p119 = scmp.eq.s32.totalorder %s16, 7
      %p120 = por %p118, %p119
      %p121 = scmp.ne.s32.totalorder %s113, %s116
      %p122 = scmp.eq.s32.totalorder %s16, 0
      %p123 = por %p121, %p122
      %p124 = scmp.ne.s32.totalorder %s113, %s116
      %p125 = scmp.eq.s32.totalorder %s21, 7
      %p126 = por %p124, %p125
      %p127 = scmp.ne.s32.totalorder %s116, %s117
      %p128 = scmp.eq.s32.totalorder %s21, 0
      %p129 = por %p127, %p128
      %p130 = scmp.ne.s32.totalorder %s116, %s117
      %p131 = scmp.eq.s32.totalorder %s22, 7
      %p132 = por %p130, %p131
      %p134 = scmp.ne.s32.totalorder %s117, %s133
      %p135 = scmp.eq.s32.totalorder %s22, 0
      %p136 = por %p134, %p135
      %p137 = scmp.le.s32.totalorder 1, %s16
      %p138 = scmp.lt.s32.totalorder %s16, 9
      %p139 = pnand %p137, %p138
      %p140 = pneg %p139
      // Predicated region
      $region9: #{tpu_custom_call.1} parent=5 // pred_check
        _
      $region10: #{tpu_custom_call.1} parent=5 // pred_check_branch
        %142 = sbr.rel (%p139) target = $region12
      $region11: #{tpu_custom_call.1} parent=5 // pred_region
        %s143 = ssub.s32 %s16, 1
        // Predicated region
        $region13: #{tpu_custom_call.1} parent=11 // pred_check
          %p144 = pneg %p77
        $region14: #{tpu_custom_call.1} parent=11 // pred_check_branch
          %146 = sbr.rel (%p144) target = $region16
        $region15: #{tpu_custom_call.1} parent=11 // pred_region
          _
        $region16: #{tpu_custom_call.1} parent=11 // pred_fallthru
          _
      $region12: #{tpu_custom_call.1} parent=5 // pred_fallthru
        _
      %p147 = scmp.lt.s32.totalorder %s16, 8
      // Predicated region
      $region17: #{tpu_custom_call.1} parent=5 // pred_check
        %p148 = pneg %p147
      $region18: #{tpu_custom_call.1} parent=5 // pred_check_branch
        %150 = sbr.rel (%p148) target = $region20
      $region19: #{tpu_custom_call.1} parent=5 // pred_region
        // Predicated region
        $region21: #{tpu_custom_call.1} parent=19 // pred_check
          %p151 = pneg %p50
        $region22: #{tpu_custom_call.1} parent=19 // pred_check_branch
          %153 = sbr.rel (%p151) target = $region24
        $region23: #{tpu_custom_call.1} parent=19 // pred_region
          %s154 = smul.u32 16, %s24
          %s155 = ssub.s32 51, %s154
          %p156 = scmp.lt.s32.totalorder %s155, 16
          %s157 = scalar_select %p156, %s155, 16
          %s158 = smul.u32 4, %s157
          %p159 = scmp.lt.s32.totalorder %s23, 1
          %s160 = scalar_select %p159, %s23, 1
          %p161 = scmp.lt.s32.totalorder %s154, 50
          %s162 = scalar_select %p161, %s154, 50
          %s163 = smul.addr %s160, 51
          %s164 = sadd.s32 %s162, %s163
          %s165 = smul.addr %s164, 4
          %s166 = scalar_lea.vmem %s0, %s165
          %s167 = smul.u32 16, %s24
          %s168 = ssub.s32 51, %s167
          %p169 = scmp.lt.s32.totalorder %s168, 16
          %s170 = scalar_select %p169, %s168, 16
          %s171 = smul.u32 4, %s170
        $region24: #{tpu_custom_call.1} parent=19 // pred_fallthru
          _
      $region20: #{tpu_custom_call.1} parent=5 // pred_fallthru
        _
      %p172 = scmp.le.s32.totalorder 1, %s16
      %p173 = scmp.lt.s32.totalorder %s16, 9
      %p174 = pnand %p172, %p173
      %p175 = pneg %p174
      // Predicated region
      $region25: #{tpu_custom_call.1} parent=5 // pred_check
        _
      $region26: #{tpu_custom_call.1} parent=5 // pred_check_branch
        %177 = sbr.rel (%p174) target = $region28
      $region27: #{tpu_custom_call.1} parent=5 // pred_region
        %s178 = ssub.s32 %s16, 1
        %s179 = smul.u32 16, %s26
        %s180 = ssub.s32 51, %s179
        %p181 = scmp.lt.s32.totalorder %s180, 16
        %s182 = scalar_select %p181, %s180, 16
        %s183 = smul.u32 4, %s182
        %p184 = scmp.lt.s32.totalorder %s25, 1
        %s185 = scalar_select %p184, %s25, 1
        %p186 = scmp.lt.s32.totalorder %s179, 50
        %s187 = scalar_select %p186, %s179, 50
        %s188 = smul.addr %s185, 51
        %s189 = sadd.s32 %s187, %s188
        %s190 = smul.addr %s189, 4
        %s191 = scalar_lea.vmem %s0, %s190
        %p192 = pneg %p56
        %p193 = pneg %p53
        %p194 = pneg %p77
        %p195 = pneg %p74
        %p196 = pneg %p103
        %p197 = pneg %p100
        %s198 = sand.u32 %s90, 1
        %s199 = scalar_lea.sflag [#allocation3], %s198
        %s200 = sand.u32 %s90, 1
        %s201 = scalar_lea.vmem [#allocation2], %s200
        %p202 = pneg %p129
        %p203 = pneg %p126
        %s204 = sand.u32 %s116, 1
        %s205 = scalar_lea.sflag [#allocation5], %s204
        %s206 = sand.u32 %s116, 1
        %s207 = scalar_lea.vmem [#allocation4], %s206
        %s208 = smul.u32 16, %s26
        %s209 = ssub.s32 51, %s208
        %p210 = scmp.lt.s32.totalorder %s209, 16
        %s211 = scalar_select %p210, %s209, 16
        %s212 = smul.u32 4, %s211
        %p213 = scmp.lt.s32.totalorder %s25, 1
        %s214 = scalar_select %p213, %s25, 1
        %p215 = scmp.lt.s32.totalorder %s208, 50
        %s216 = scalar_select %p215, %s208, 50
        %s217 = smul.addr %s214, 51
        %s218 = sadd.s32 %s216, %s217
        %s219 = smul.addr %s218, 4
        %s220 = scalar_lea.vmem %s0, %s219
        %s221 = smul.u32 16, %s26
        %s222 = ssub.s32 51, %s221
        %p223 = scmp.lt.s32.totalorder %s222, 16
        %s224 = scalar_select %p223, %s222, 16
        %s225 = smul.u32 4, %s224
        %p226 = scmp.eq.s32.totalorder %s26, 0
        // Predicated region
        $region29: #{tpu_custom_call.1} parent=27 // pred_check
          %p227 = pneg %p226
        $region30: #{tpu_custom_call.1} parent=27 // pred_check_branch
          %229 = sbr.rel (%p227) target = $region32
        $region31: #{tpu_custom_call.1} parent=27 // pred_region
          %vm230 = vcmask 516096
          %231 = vst.msk [vmem:[%s201] sm:$0x1] %vm230, 0.0
          %232 = vst.msk [vmem:[%s207] sm:$0x1] %vm230, 0.0
        $region32: #{tpu_custom_call.1} parent=27 // pred_fallthru
          _
        %v233 = vld [vmem:[%s220] sm:$0xf]
        %v234 = vld [vmem:[%s220 + $0x4] sm:$0xf]
        %v235 = vld [vmem:[%s220 + $0x8] sm:$0xf]
        %v236 = vld [vmem:[%s220 + $0xc] sm:$0xf]
        %v237 = vld [vmem:[%s220 + $0x10] sm:$0xf]
        %v238 = vld [vmem:[%s220 + $0x14] sm:$0xf]
        %v239 = vld [vmem:[%s220 + $0x18] sm:$0xf]
        %v240 = vld [vmem:[%s220 + $0x1c] sm:$0xf]
        %v241 = vld [vmem:[%s220 + $0x20] sm:$0xf]
        %v242 = vld [vmem:[%s220 + $0x24] sm:$0xf]
        %v243 = vld [vmem:[%s220 + $0x28] sm:$0xf]
        %v244 = vld [vmem:[%s220 + $0x2c] sm:$0xf]
        %v245 = vld [vmem:[%s220 + $0x30] sm:$0xf]
        %v246 = vld [vmem:[%s220 + $0x34] sm:$0xf]
        %v247 = vld [vmem:[%s220 + $0x38] sm:$0xf]
        %v248 = vld [vmem:[%s220 + $0x3c] sm:$0xf]
        %v249 = vld [vmem:[%s1] sm:$0xf]
        %v250 = vld [vmem:[%s1 + $0x4] sm:$0x1]
        %v251 = vunpack.c.l.bf16 %v233
        %v252 = vunpack.c.l.bf16 %v234
        %v253 = vunpack.c.l.bf16 %v235
        %v254 = vunpack.c.l.bf16 %v236
        %v255 = vunpack.c.l.bf16 %v237
        %v256 = vunpack.c.l.bf16 %v238
        %v257 = vunpack.c.l.bf16 %v239
        %v258 = vunpack.c.l.bf16 %v240
        %v259 = vunpack.c.l.bf16 %v241
        %v260 = vunpack.c.l.bf16 %v242
        %v261 = vunpack.c.l.bf16 %v243
        %v262 = vunpack.c.l.bf16 %v244
        %v263 = vunpack.c.l.bf16 %v245
        %v264 = vunpack.c.l.bf16 %v246
        %v265 = vunpack.c.l.bf16 %v247
        %v266 = vunpack.c.l.bf16 %v248
        %v267 = vunpack.c.l.bf16 %v249
        %v268 = vunpack.c.l.bf16 %v250
        %270 = vset.pattern.permute.xlu0 0
        %271 = vperm.xlu0 %270, %v251
        %v272 = vpop.permute.xlu0 %271
        %275 = vset.pattern.permute.xlu0 0
        %276 = vperm.xlu0 %275, %v252
        %v277 = vpop.permute.xlu0 %276
        %280 = vset.pattern.permute.xlu0 0
        %281 = vperm.xlu0 %280, %v253
        %v282 = vpop.permute.xlu0 %281
        %285 = vset.pattern.permute.xlu0 0
        %286 = vperm.xlu0 %285, %v254
        %v287 = vpop.permute.xlu0 %286
        %290 = vset.pattern.permute.xlu0 0
        %291 = vperm.xlu0 %290, %v255
        %v292 = vpop.permute.xlu0 %291
        %295 = vset.pattern.permute.xlu0 0
        %296 = vperm.xlu0 %295, %v256
        %v297 = vpop.permute.xlu0 %296
        %300 = vset.pattern.permute.xlu0 0
        %301 = vperm.xlu0 %300, %v257
        %v302 = vpop.permute.xlu0 %301
        %305 = vset.pattern.permute.xlu0 0
        %306 = vperm.xlu0 %305, %v258
        %v307 = vpop.permute.xlu0 %306
        %310 = vset.pattern.permute.xlu0 0
        %311 = vperm.xlu0 %310, %v259
        %v312 = vpop.permute.xlu0 %311
        %315 = vset.pattern.permute.xlu0 0
        %316 = vperm.xlu0 %315, %v260
        %v317 = vpop.permute.xlu0 %316
        %320 = vset.pattern.permute.xlu0 0
        %321 = vperm.xlu0 %320, %v261
        %v322 = vpop.permute.xlu0 %321
        %325 = vset.pattern.permute.xlu0 0
        %326 = vperm.xlu0 %325, %v262
        %v327 = vpop.permute.xlu0 %326
        %330 = vset.pattern.permute.xlu0 0
        %331 = vperm.xlu0 %330, %v263
        %v332 = vpop.permute.xlu0 %331
        %335 = vset.pattern.permute.xlu0 0
        %336 = vperm.xlu0 %335, %v264
        %v337 = vpop.permute.xlu0 %336
        %340 = vset.pattern.permute.xlu0 0
        %341 = vperm.xlu0 %340, %v265
        %v342 = vpop.permute.xlu0 %341
        %345 = vset.pattern.permute.xlu0 0
        %346 = vperm.xlu0 %345, %v266
        %v347 = vpop.permute.xlu0 %346
        %v349 = vperm.slane %v267, 0
        %v350 = vmul.f32 %v272, %v349
        %v351 = vmul.f32 %v277, %v349
        %v352 = vmul.f32 %v282, %v349
        %v353 = vmul.f32 %v287, %v349
        %v354 = vmul.f32 %v292, %v349
        %v355 = vmul.f32 %v297, %v349
        %v356 = vmul.f32 %v302, %v349
        %v357 = vmul.f32 %v307, %v349
        %v358 = vmul.f32 %v312, %v349
        %v359 = vmul.f32 %v317, %v349
        %v360 = vmul.f32 %v322, %v349
        %v361 = vmul.f32 %v327, %v349
        %v362 = vmul.f32 %v332, %v349
        %v363 = vmul.f32 %v337, %v349
        %v364 = vmul.f32 %v342, %v349
        %v365 = vmul.f32 %v347, %v349
        %366 = vset.pattern.permute.xlu0 1
        %367 = vperm.xlu0 %366, %v251
        %v368 = vpop.permute.xlu0 %367
        %370 = vset.pattern.permute.xlu0 1
        %371 = vperm.xlu0 %370, %v252
        %v372 = vpop.permute.xlu0 %371
        %374 = vset.pattern.permute.xlu0 1
        %375 = vperm.xlu0 %374, %v253
        %v376 = vpop.permute.xlu0 %375
        %378 = vset.pattern.permute.xlu0 1
        %379 = vperm.xlu0 %378, %v254
        %v380 = vpop.permute.xlu0 %379
        %382 = vset.pattern.permute.xlu0 1
        %383 = vperm.xlu0 %382, %v255
        %v384 = vpop.permute.xlu0 %383
        %386 = vset.pattern.permute.xlu0 1
        %387 = vperm.xlu0 %386, %v256
        %v388 = vpop.permute.xlu0 %387
        %390 = vset.pattern.permute.xlu0 1
        %391 = vperm.xlu0 %390, %v257
        %v392 = vpop.permute.xlu0 %391
        %394 = vset.pattern.permute.xlu0 1
        %395 = vperm.xlu0 %394, %v258
        %v396 = vpop.permute.xlu0 %395
        %398 = vset.pattern.permute.xlu0 1
        %399 = vperm.xlu0 %398, %v259
        %v400 = vpop.permute.xlu0 %399
        %402 = vset.pattern.permute.xlu0 1
        %403 = vperm.xlu0 %402, %v260
        %v404 = vpop.permute.xlu0 %403
        %406 = vset.pattern.permute.xlu0 1
        %407 = vperm.xlu0 %406, %v261
        %v408 = vpop.permute.xlu0 %407
        %410 = vset.pattern.permute.xlu0 1
        %411 = vperm.xlu0 %410, %v262
        %v412 = vpop.permute.xlu0 %411
        %414 = vset.pattern.permute.xlu0 1
        %415 = vperm.xlu0 %414, %v263
        %v416 = vpop.permute.xlu0 %415
        %418 = vset.pattern.permute.xlu0 1
        %419 = vperm.xlu0 %418, %v264
        %v420 = vpop.permute.xlu0 %419
        %422 = vset.pattern.permute.xlu0 1
        %423 = vperm.xlu0 %422, %v265
        %v424 = vpop.permute.xlu0 %423
        %426 = vset.pattern.permute.xlu0 1
        %427 = vperm.xlu0 %426, %v266
        %v428 = vpop.permute.xlu0 %427
        %v430 = vperm.slane %v267, 1
        %v431 = vmul.f32 %v368, %v430
        %v432 = vmul.f32 %v372, %v430
        %v433 = vmul.f32 %v376, %v430
        %v434 = vmul.f32 %v380, %v430
        %v435 = vmul.f32 %v384, %v430
        %v436 = vmul.f32 %v388, %v430
        %v437 = vmul.f32 %v392, %v430
        %v438 = vmul.f32 %v396, %v430
        %v439 = vmul.f32 %v400, %v430
        %v440 = vmul.f32 %v404, %v430
        %v441 = vmul.f32 %v408, %v430
        %v442 = vmul.f32 %v412, %v430
        %v443 = vmul.f32 %v416, %v430
        %v444 = vmul.f32 %v420, %v430
        %v445 = vmul.f32 %v424, %v430
        %v446 = vmul.f32 %v428, %v430
        %v447 = vadd.f32 %v350, %v431
        %v448 = vadd.f32 %v351, %v432
        %v449 = vadd.f32 %v352, %v433
        %v450 = vadd.f32 %v353, %v434
        %v451 = vadd.f32 %v354, %v435
        %v452 = vadd.f32 %v355, %v436
        %v453 = vadd.f32 %v356, %v437
        %v454 = vadd.f32 %v357, %v438
        %v455 = vadd.f32 %v358, %v439
        %v456 = vadd.f32 %v359, %v440
        %v457 = vadd.f32 %v360, %v441
        %v458 = vadd.f32 %v361, %v442
        %v459 = vadd.f32 %v362, %v443
        %v460 = vadd.f32 %v363, %v444
        %v461 = vadd.f32 %v364, %v445
        %v462 = vadd.f32 %v365, %v446
        %463 = vset.pattern.permute.xlu0 2
        %464 = vperm.xlu0 %463, %v251
        %v465 = vpop.permute.xlu0 %464
        %467 = vset.pattern.permute.xlu0 2
        %468 = vperm.xlu0 %467, %v252
        %v469 = vpop.permute.xlu0 %468
        %471 = vset.pattern.permute.xlu0 2
        %472 = vperm.xlu0 %471, %v253
        %v473 = vpop.permute.xlu0 %472
        %475 = vset.pattern.permute.xlu0 2
        %476 = vperm.xlu0 %475, %v254
        %v477 = vpop.permute.xlu0 %476
        %479 = vset.pattern.permute.xlu0 2
        %480 = vperm.xlu0 %479, %v255
        %v481 = vpop.permute.xlu0 %480
        %483 = vset.pattern.permute.xlu0 2
        %484 = vperm.xlu0 %483, %v256
        %v485 = vpop.permute.xlu0 %484
        %487 = vset.pattern.permute.xlu0 2
        %488 = vperm.xlu0 %487, %v257
        %v489 = vpop.permute.xlu0 %488
        %491 = vset.pattern.permute.xlu0 2
        %492 = vperm.xlu0 %491, %v258
        %v493 = vpop.permute.xlu0 %492
        %495 = vset.pattern.permute.xlu0 2
        %496 = vperm.xlu0 %495, %v259
        %v497 = vpop.permute.xlu0 %496
        %499 = vset.pattern.permute.xlu0 2
        %500 = vperm.xlu0 %499, %v260
        %v501 = vpop.permute.xlu0 %500
        %503 = vset.pattern.permute.xlu0 2
        %504 = vperm.xlu0 %503, %v261
        %v505 = vpop.permute.xlu0 %504
        %507 = vset.pattern.permute.xlu0 2
        %508 = vperm.xlu0 %507, %v262
        %v509 = vpop.permute.xlu0 %508
        %511 = vset.pattern.permute.xlu0 2
        %512 = vperm.xlu0 %511, %v263
        %v513 = vpop.permute.xlu0 %512
        %515 = vset.pattern.permute.xlu0 2
        %516 = vperm.xlu0 %515, %v264
        %v517 = vpop.permute.xlu0 %516
        %519 = vset.pattern.permute.xlu0 2
        %520 = vperm.xlu0 %519, %v265
        %v521 = vpop.permute.xlu0 %520
        %523 = vset.pattern.permute.xlu0 2
        %524 = vperm.xlu0 %523, %v266
        %v525 = vpop.permute.xlu0 %524
        %v527 = vperm.slane %v267, 2
        %v528 = vmul.f32 %v465, %v527
        %v529 = vmul.f32 %v469, %v527
        %v530 = vmul.f32 %v473, %v527
        %v531 = vmul.f32 %v477, %v527
        %v532 = vmul.f32 %v481, %v527
        %v533 = vmul.f32 %v485, %v527
        %v534 = vmul.f32 %v489, %v527
        %v535 = vmul.f32 %v493, %v527
        %v536 = vmul.f32 %v497, %v527
        %v537 = vmul.f32 %v501, %v527
        %v538 = vmul.f32 %v505, %v527
        %v539 = vmul.f32 %v509, %v527
        %v540 = vmul.f32 %v513, %v527
        %v541 = vmul.f32 %v517, %v527
        %v542 = vmul.f32 %v521, %v527
        %v543 = vmul.f32 %v525, %v527
        %v544 = vadd.f32 %v447, %v528
        %v545 = vadd.f32 %v448, %v529
        %v546 = vadd.f32 %v449, %v530
        %v547 = vadd.f32 %v450, %v531
        %v548 = vadd.f32 %v451, %v532
        %v549 = vadd.f32 %v452, %v533
        %v550 = vadd.f32 %v453, %v534
        %v551 = vadd.f32 %v454, %v535
        %v552 = vadd.f32 %v455, %v536
        %v553 = vadd.f32 %v456, %v537
        %v554 = vadd.f32 %v457, %v538
        %v555 = vadd.f32 %v458, %v539
        %v556 = vadd.f32 %v459, %v540
        %v557 = vadd.f32 %v460, %v541
        %v558 = vadd.f32 %v461, %v542
        %v559 = vadd.f32 %v462, %v543
        %560 = vset.pattern.permute.xlu0 3
        %561 = vperm.xlu0 %560, %v251
        %v562 = vpop.permute.xlu0 %561
        %564 = vset.pattern.permute.xlu0 3
        %565 = vperm.xlu0 %564, %v252
        %v566 = vpop.permute.xlu0 %565
        %568 = vset.pattern.permute.xlu0 3
        %569 = vperm.xlu0 %568, %v253
        %v570 = vpop.permute.xlu0 %569
        %572 = vset.pattern.permute.xlu0 3
        %573 = vperm.xlu0 %572, %v254
        %v574 = vpop.permute.xlu0 %573
        %576 = vset.pattern.permute.xlu0 3
        %577 = vperm.xlu0 %576, %v255
        %v578 = vpop.permute.xlu0 %577
        %580 = vset.pattern.permute.xlu0 3
        %581 = vperm.xlu0 %580, %v256
        %v582 = vpop.permute.xlu0 %581
        %584 = vset.pattern.permute.xlu0 3
        %585 = vperm.xlu0 %584, %v257
        %v586 = vpop.permute.xlu0 %585
        %588 = vset.pattern.permute.xlu0 3
        %589 = vperm.xlu0 %588, %v258
        %v590 = vpop.permute.xlu0 %589
        %592 = vset.pattern.permute.xlu0 3
        %593 = vperm.xlu0 %592, %v259
        %v594 = vpop.permute.xlu0 %593
        %596 = vset.pattern.permute.xlu0 3
        %597 = vperm.xlu0 %596, %v260
        %v598 = vpop.permute.xlu0 %597
        %600 = vset.pattern.permute.xlu0 3
        %601 = vperm.xlu0 %600, %v261
        %v602 = vpop.permute.xlu0 %601
        %604 = vset.pattern.permute.xlu0 3
        %605 = vperm.xlu0 %604, %v262
        %v606 = vpop.permute.xlu0 %605
        %608 = vset.pattern.permute.xlu0 3
        %609 = vperm.xlu0 %608, %v263
        %v610 = vpop.permute.xlu0 %609
        %612 = vset.pattern.permute.xlu0 3
        %613 = vperm.xlu0 %612, %v264
        %v614 = vpop.permute.xlu0 %613
        %616 = vset.pattern.permute.xlu0 3
        %617 = vperm.xlu0 %616, %v265
        %v618 = vpop.permute.xlu0 %617
        %620 = vset.pattern.permute.xlu0 3
        %621 = vperm.xlu0 %620, %v266
        %v622 = vpop.permute.xlu0 %621
        %v624 = vperm.slane %v267, 3
        %v625 = vmul.f32 %v562, %v624
        %v626 = vmul.f32 %v566, %v624
        %v627 = vmul.f32 %v570, %v624
        %v628 = vmul.f32 %v574, %v624
        %v629 = vmul.f32 %v578, %v624
        %v630 = vmul.f32 %v582, %v624
        %v631 = vmul.f32 %v586, %v624
        %v632 = vmul.f32 %v590, %v624
        %v633 = vmul.f32 %v594, %v624
        %v634 = vmul.f32 %v598, %v624
        %v635 = vmul.f32 %v602, %v624
        %v636 = vmul.f32 %v606, %v624
        %v637 = vmul.f32 %v610, %v624
        %v638 = vmul.f32 %v614, %v624
        %v639 = vmul.f32 %v618, %v624
        %v640 = vmul.f32 %v622, %v624
        %v641 = vadd.f32 %v544, %v625
        %v642 = vadd.f32 %v545, %v626
        %v643 = vadd.f32 %v546, %v627
        %v644 = vadd.f32 %v547, %v628
        %v645 = vadd.f32 %v548, %v629
        %v646 = vadd.f32 %v549, %v630
        %v647 = vadd.f32 %v550, %v631
        %v648 = vadd.f32 %v551, %v632
        %v649 = vadd.f32 %v552, %v633
        %v650 = vadd.f32 %v553, %v634
        %v651 = vadd.f32 %v554, %v635
        %v652 = vadd.f32 %v555, %v636
        %v653 = vadd.f32 %v556, %v637
        %v654 = vadd.f32 %v557, %v638
        %v655 = vadd.f32 %v558, %v639
        %v656 = vadd.f32 %v559, %v640
        %657 = vset.pattern.permute.xlu0 4
        %658 = vperm.xlu0 %657, %v251
        %v659 = vpop.permute.xlu0 %658
        %661 = vset.pattern.permute.xlu0 4
        %662 = vperm.xlu0 %661, %v252
        %v663 = vpop.permute.xlu0 %662
        %665 = vset.pattern.permute.xlu0 4
        %666 = vperm.xlu0 %665, %v253
        %v667 = vpop.permute.xlu0 %666
        %669 = vset.pattern.permute.xlu0 4
        %670 = vperm.xlu0 %669, %v254
        %v671 = vpop.permute.xlu0 %670
        %673 = vset.pattern.permute.xlu0 4
        %674 = vperm.xlu0 %673, %v255
        %v675 = vpop.permute.xlu0 %674
        %677 = vset.pattern.permute.xlu0 4
        %678 = vperm.xlu0 %677, %v256
        %v679 = vpop.permute.xlu0 %678
        %681 = vset.pattern.permute.xlu0 4
        %682 = vperm.xlu0 %681, %v257
        %v683 = vpop.permute.xlu0 %682
        %685 = vset.pattern.permute.xlu0 4
        %686 = vperm.xlu0 %685, %v258
        %v687 = vpop.permute.xlu0 %686
        %689 = vset.pattern.permute.xlu0 4
        %690 = vperm.xlu0 %689, %v259
        %v691 = vpop.permute.xlu0 %690
        %693 = vset.pattern.permute.xlu0 4
        %694 = vperm.xlu0 %693, %v260
        %v695 = vpop.permute.xlu0 %694
        %697 = vset.pattern.permute.xlu0 4
        %698 = vperm.xlu0 %697, %v261
        %v699 = vpop.permute.xlu0 %698
        %701 = vset.pattern.permute.xlu0 4
        %702 = vperm.xlu0 %701, %v262
        %v703 = vpop.permute.xlu0 %702
        %705 = vset.pattern.permute.xlu0 4
        %706 = vperm.xlu0 %705, %v263
        %v707 = vpop.permute.xlu0 %706
        %709 = vset.pattern.permute.xlu0 4
        %710 = vperm.xlu0 %709, %v264
        %v711 = vpop.permute.xlu0 %710
        %713 = vset.pattern.permute.xlu0 4
        %714 = vperm.xlu0 %713, %v265
        %v715 = vpop.permute.xlu0 %714
        %717 = vset.pattern.permute.xlu0 4
        %718 = vperm.xlu0 %717, %v266
        %v719 = vpop.permute.xlu0 %718
        %v721 = vperm.slane %v267, 4
        %v722 = vmul.f32 %v659, %v721
        %v723 = vmul.f32 %v663, %v721
        %v724 = vmul.f32 %v667, %v721
        %v725 = vmul.f32 %v671, %v721
        %v726 = vmul.f32 %v675, %v721
        %v727 = vmul.f32 %v679, %v721
        %v728 = vmul.f32 %v683, %v721
        %v729 = vmul.f32 %v687, %v721
        %v730 = vmul.f32 %v691, %v721
        %v731 = vmul.f32 %v695, %v721
        %v732 = vmul.f32 %v699, %v721
        %v733 = vmul.f32 %v703, %v721
        %v734 = vmul.f32 %v707, %v721
        %v735 = vmul.f32 %v711, %v721
        %v736 = vmul.f32 %v715, %v721
        %v737 = vmul.f32 %v719, %v721
        %v738 = vadd.f32 %v641, %v722
        %v739 = vadd.f32 %v642, %v723
        %v740 = vadd.f32 %v643, %v724
        %v741 = vadd.f32 %v644, %v725
        %v742 = vadd.f32 %v645, %v726
        %v743 = vadd.f32 %v646, %v727
        %v744 = vadd.f32 %v647, %v728
        %v745 = vadd.f32 %v648, %v729
        %v746 = vadd.f32 %v649, %v730
        %v747 = vadd.f32 %v650, %v731
        %v748 = vadd.f32 %v651, %v732
        %v749 = vadd.f32 %v652, %v733
        %v750 = vadd.f32 %v653, %v734
        %v751 = vadd.f32 %v654, %v735
        %v752 = vadd.f32 %v655, %v736
        %v753 = vadd.f32 %v656, %v737
        %754 = vset.pattern.permute.xlu0 5
        %755 = vperm.xlu0 %754, %v251
        %v756 = vpop.permute.xlu0 %755
        %758 = vset.pattern.permute.xlu0 5
        %759 = vperm.xlu0 %758, %v252
        %v760 = vpop.permute.xlu0 %759
        %762 = vset.pattern.permute.xlu0 5
        %763 = vperm.xlu0 %762, %v253
        %v764 = vpop.permute.xlu0 %763
        %766 = vset.pattern.permute.xlu0 5
        %767 = vperm.xlu0 %766, %v254
        %v768 = vpop.permute.xlu0 %767
        %770 = vset.pattern.permute.xlu0 5
        %771 = vperm.xlu0 %770, %v255
        %v772 = vpop.permute.xlu0 %771
        %774 = vset.pattern.permute.xlu0 5
        %775 = vperm.xlu0 %774, %v256
        %v776 = vpop.permute.xlu0 %775
        %778 = vset.pattern.permute.xlu0 5
        %779 = vperm.xlu0 %778, %v257
        %v780 = vpop.permute.xlu0 %779
        %782 = vset.pattern.permute.xlu0 5
        %783 = vperm.xlu0 %782, %v258
        %v784 = vpop.permute.xlu0 %783
        %786 = vset.pattern.permute.xlu0 5
        %787 = vperm.xlu0 %786, %v259
        %v788 = vpop.permute.xlu0 %787
        %790 = vset.pattern.permute.xlu0 5
        %791 = vperm.xlu0 %790, %v260
        %v792 = vpop.permute.xlu0 %791
        %794 = vset.pattern.permute.xlu0 5
        %795 = vperm.xlu0 %794, %v261
        %v796 = vpop.permute.xlu0 %795
        %798 = vset.pattern.permute.xlu0 5
        %799 = vperm.xlu0 %798, %v262
        %v800 = vpop.permute.xlu0 %799
        %802 = vset.pattern.permute.xlu0 5
        %803 = vperm.xlu0 %802, %v263
        %v804 = vpop.permute.xlu0 %803
        %806 = vset.pattern.permute.xlu0 5
        %807 = vperm.xlu0 %806, %v264
        %v808 = vpop.permute.xlu0 %807
        %810 = vset.pattern.permute.xlu0 5
        %811 = vperm.xlu0 %810, %v265
        %v812 = vpop.permute.xlu0 %811
        %814 = vset.pattern.permute.xlu0 5
        %815 = vperm.xlu0 %814, %v266
        %v816 = vpop.permute.xlu0 %815
        %v818 = vperm.slane %v267, 5
        %v819 = vmul.f32 %v756, %v818
        %v820 = vmul.f32 %v760, %v818
        %v821 = vmul.f32 %v764, %v818
        %v822 = vmul.f32 %v768, %v818
        %v823 = vmul.f32 %v772, %v818
        %v824 = vmul.f32 %v776, %v818
        %v825 = vmul.f32 %v780, %v818
        %v826 = vmul.f32 %v784, %v818
        %v827 = vmul.f32 %v788, %v818
        %v828 = vmul.f32 %v792, %v818
        %v829 = vmul.f32 %v796, %v818
        %v830 = vmul.f32 %v800, %v818
        %v831 = vmul.f32 %v804, %v818
        %v832 = vmul.f32 %v808, %v818
        %v833 = vmul.f32 %v812, %v818
        %v834 = vmul.f32 %v816, %v818
        %v835 = vadd.f32 %v738, %v819
        %v836 = vadd.f32 %v739, %v820
        %v837 = vadd.f32 %v740, %v821
        %v838 = vadd.f32 %v741, %v822
        %v839 = vadd.f32 %v742, %v823
        %v840 = vadd.f32 %v743, %v824
        %v841 = vadd.f32 %v744, %v825
        %v842 = vadd.f32 %v745, %v826
        %v843 = vadd.f32 %v746, %v827
        %v844 = vadd.f32 %v747, %v828
        %v845 = vadd.f32 %v748, %v829
        %v846 = vadd.f32 %v749, %v830
        %v847 = vadd.f32 %v750, %v831
        %v848 = vadd.f32 %v751, %v832
        %v849 = vadd.f32 %v752, %v833
        %v850 = vadd.f32 %v753, %v834
        %851 = vset.pattern.permute.xlu0 6
        %852 = vperm.xlu0 %851, %v251
        %v853 = vpop.permute.xlu0 %852
        %855 = vset.pattern.permute.xlu0 6
        %856 = vperm.xlu0 %855, %v252
        %v857 = vpop.permute.xlu0 %856
        %859 = vset.pattern.permute.xlu0 6
        %860 = vperm.xlu0 %859, %v253
        %v861 = vpop.permute.xlu0 %860
        %863 = vset.pattern.permute.xlu0 6
        %864 = vperm.xlu0 %863, %v254
        %v865 = vpop.permute.xlu0 %864
        %867 = vset.pattern.permute.xlu0 6
        %868 = vperm.xlu0 %867, %v255
        %v869 = vpop.permute.xlu0 %868
        %871 = vset.pattern.permute.xlu0 6
        %872 = vperm.xlu0 %871, %v256
        %v873 = vpop.permute.xlu0 %872
        %875 = vset.pattern.permute.xlu0 6
        %876 = vperm.xlu0 %875, %v257
        %v877 = vpop.permute.xlu0 %876
        %879 = vset.pattern.permute.xlu0 6
        %880 = vperm.xlu0 %879, %v258
        %v881 = vpop.permute.xlu0 %880
        %883 = vset.pattern.permute.xlu0 6
        %884 = vperm.xlu0 %883, %v259
        %v885 = vpop.permute.xlu0 %884
        %887 = vset.pattern.permute.xlu0 6
        %888 = vperm.xlu0 %887, %v260
        %v889 = vpop.permute.xlu0 %888
        %891 = vset.pattern.permute.xlu0 6
        %892 = vperm.xlu0 %891, %v261
        %v893 = vpop.permute.xlu0 %892
        %895 = vset.pattern.permute.xlu0 6
        %896 = vperm.xlu0 %895, %v262
        %v897 = vpop.permute.xlu0 %896
        %899 = vset.pattern.permute.xlu0 6
        %900 = vperm.xlu0 %899, %v263
        %v901 = vpop.permute.xlu0 %900
        %903 = vset.pattern.permute.xlu0 6
        %904 = vperm.xlu0 %903, %v264
        %v905 = vpop.permute.xlu0 %904
        %907 = vset.pattern.permute.xlu0 6
        %908 = vperm.xlu0 %907, %v265
        %v909 = vpop.permute.xlu0 %908
        %911 = vset.pattern.permute.xlu0 6
        %912 = vperm.xlu0 %911, %v266
        %v913 = vpop.permute.xlu0 %912
        %v915 = vperm.slane %v267, 6
        %v916 = vmul.f32 %v853, %v915
        %v917 = vmul.f32 %v857, %v915
        %v918 = vmul.f32 %v861, %v915
        %v919 = vmul.f32 %v865, %v915
        %v920 = vmul.f32 %v869, %v915
        %v921 = vmul.f32 %v873, %v915
        %v922 = vmul.f32 %v877, %v915
        %v923 = vmul.f32 %v881, %v915
        %v924 = vmul.f32 %v885, %v915
        %v925 = vmul.f32 %v889, %v915
        %v926 = vmul.f32 %v893, %v915
        %v927 = vmul.f32 %v897, %v915
        %v928 = vmul.f32 %v901, %v915
        %v929 = vmul.f32 %v905, %v915
        %v930 = vmul.f32 %v909, %v915
        %v931 = vmul.f32 %v913, %v915
        %v932 = vadd.f32 %v835, %v916
        %v933 = vadd.f32 %v836, %v917
        %v934 = vadd.f32 %v837, %v918
        %v935 = vadd.f32 %v838, %v919
        %v936 = vadd.f32 %v839, %v920
        %v937 = vadd.f32 %v840, %v921
        %v938 = vadd.f32 %v841, %v922
        %v939 = vadd.f32 %v842, %v923
        %v940 = vadd.f32 %v843, %v924
        %v941 = vadd.f32 %v844, %v925
        %v942 = vadd.f32 %v845, %v926
        %v943 = vadd.f32 %v846, %v927
        %v944 = vadd.f32 %v847, %v928
        %v945 = vadd.f32 %v848, %v929
        %v946 = vadd.f32 %v849, %v930
        %v947 = vadd.f32 %v850, %v931
        %948 = vset.pattern.permute.xlu0 7
        %949 = vperm.xlu0 %948, %v251
        %v950 = vpop.permute.xlu0 %949
        %952 = vset.pattern.permute.xlu0 7
        %953 = vperm.xlu0 %952, %v252
        %v954 = vpop.permute.xlu0 %953
        %956 = vset.pattern.permute.xlu0 7
        %957 = vperm.xlu0 %956, %v253
        %v958 = vpop.permute.xlu0 %957
        %960 = vset.pattern.permute.xlu0 7
        %961 = vperm.xlu0 %960, %v254
        %v962 = vpop.permute.xlu0 %961
        %964 = vset.pattern.permute.xlu0 7
        %965 = vperm.xlu0 %964, %v255
        %v966 = vpop.permute.xlu0 %965
        %968 = vset.pattern.permute.xlu0 7
        %969 = vperm.xlu0 %968, %v256
        %v970 = vpop.permute.xlu0 %969
        %972 = vset.pattern.permute.xlu0 7
        %973 = vperm.xlu0 %972, %v257
        %v974 = vpop.permute.xlu0 %973
        %976 = vset.pattern.permute.xlu0 7
        %977 = vperm.xlu0 %976, %v258
        %v978 = vpop.permute.xlu0 %977
        %980 = vset.pattern.permute.xlu0 7
        %981 = vperm.xlu0 %980, %v259
        %v982 = vpop.permute.xlu0 %981
        %984 = vset.pattern.permute.xlu0 7
        %985 = vperm.xlu0 %984, %v260
        %v986 = vpop.permute.xlu0 %985
        %988 = vset.pattern.permute.xlu0 7
        %989 = vperm.xlu0 %988, %v261
        %v990 = vpop.permute.xlu0 %989
        %992 = vset.pattern.permute.xlu0 7
        %993 = vperm.xlu0 %992, %v262
        %v994 = vpop.permute.xlu0 %993
        %996 = vset.pattern.permute.xlu0 7
        %997 = vperm.xlu0 %996, %v263
        %v998 = vpop.permute.xlu0 %997
        %1000 = vset.pattern.permute.xlu0 7
        %1001 = vperm.xlu0 %1000, %v264
        %v1002 = vpop.permute.xlu0 %1001
        %1004 = vset.pattern.permute.xlu0 7
        %1005 = vperm.xlu0 %1004, %v265
        %v1006 = vpop.permute.xlu0 %1005
        %1008 = vset.pattern.permute.xlu0 7
        %1009 = vperm.xlu0 %1008, %v266
        %v1010 = vpop.permute.xlu0 %1009
        %v1012 = vperm.slane %v267, 7
        %v1013 = vmul.f32 %v950, %v1012
        %v1014 = vmul.f32 %v954, %v1012
        %v1015 = vmul.f32 %v958, %v1012
        %v1016 = vmul.f32 %v962, %v1012
        %v1017 = vmul.f32 %v966, %v1012
        %v1018 = vmul.f32 %v970, %v1012
        %v1019 = vmul.f32 %v974, %v1012
        %v1020 = vmul.f32 %v978, %v1012
        %v1021 = vmul.f32 %v982, %v1012
        %v1022 = vmul.f32 %v986, %v1012
        %v1023 = vmul.f32 %v990, %v1012
        %v1024 = vmul.f32 %v994, %v1012
        %v1025 = vmul.f32 %v998, %v1012
        %v1026 = vmul.f32 %v1002, %v1012
        %v1027 = vmul.f32 %v1006, %v1012
        %v1028 = vmul.f32 %v1010, %v1012
        %v1029 = vadd.f32 %v932, %v1013
        %v1030 = vadd.f32 %v933, %v1014
        %v1031 = vadd.f32 %v934, %v1015
        %v1032 = vadd.f32 %v935, %v1016
        %v1033 = vadd.f32 %v936, %v1017
        %v1034 = vadd.f32 %v937, %v1018
        %v1035 = vadd.f32 %v938, %v1019
        %v1036 = vadd.f32 %v939, %v1020
        %v1037 = vadd.f32 %v940, %v1021
        %v1038 = vadd.f32 %v941, %v1022
        %v1039 = vadd.f32 %v942, %v1023
        %v1040 = vadd.f32 %v943, %v1024
        %v1041 = vadd.f32 %v944, %v1025
        %v1042 = vadd.f32 %v945, %v1026
        %v1043 = vadd.f32 %v946, %v1027
        %v1044 = vadd.f32 %v947, %v1028
        %1045 = vset.pattern.permute.xlu0 8
        %1046 = vperm.xlu0 %1045, %v251
        %v1047 = vpop.permute.xlu0 %1046
        %1049 = vset.pattern.permute.xlu0 8
        %1050 = vperm.xlu0 %1049, %v252
        %v1051 = vpop.permute.xlu0 %1050
        %1053 = vset.pattern.permute.xlu0 8
        %1054 = vperm.xlu0 %1053, %v253
        %v1055 = vpop.permute.xlu0 %1054
        %1057 = vset.pattern.permute.xlu0 8
        %1058 = vperm.xlu0 %1057, %v254
        %v1059 = vpop.permute.xlu0 %1058
        %1061 = vset.pattern.permute.xlu0 8
        %1062 = vperm.xlu0 %1061, %v255
        %v1063 = vpop.permute.xlu0 %1062
        %1065 = vset.pattern.permute.xlu0 8
        %1066 = vperm.xlu0 %1065, %v256
        %v1067 = vpop.permute.xlu0 %1066
        %1069 = vset.pattern.permute.xlu0 8
        %1070 = vperm.xlu0 %1069, %v257
        %v1071 = vpop.permute.xlu0 %1070
        %1073 = vset.pattern.permute.xlu0 8
        %1074 = vperm.xlu0 %1073, %v258
        %v1075 = vpop.permute.xlu0 %1074
        %1077 = vset.pattern.permute.xlu0 8
        %1078 = vperm.xlu0 %1077, %v259
        %v1079 = vpop.permute.xlu0 %1078
        %1081 = vset.pattern.permute.xlu0 8
        %1082 = vperm.xlu0 %1081, %v260
        %v1083 = vpop.permute.xlu0 %1082
        %1085 = vset.pattern.permute.xlu0 8
        %1086 = vperm.xlu0 %1085, %v261
        %v1087 = vpop.permute.xlu0 %1086
        %1089 = vset.pattern.permute.xlu0 8
        %1090 = vperm.xlu0 %1089, %v262
        %v1091 = vpop.permute.xlu0 %1090
        %1093 = vset.pattern.permute.xlu0 8
        %1094 = vperm.xlu0 %1093, %v263
        %v1095 = vpop.permute.xlu0 %1094
        %1097 = vset.pattern.permute.xlu0 8
        %1098 = vperm.xlu0 %1097, %v264
        %v1099 = vpop.permute.xlu0 %1098
        %1101 = vset.pattern.permute.xlu0 8
        %1102 = vperm.xlu0 %1101, %v265
        %v1103 = vpop.permute.xlu0 %1102
        %1105 = vset.pattern.permute.xlu0 8
        %1106 = vperm.xlu0 %1105, %v266
        %v1107 = vpop.permute.xlu0 %1106
        %v1109 = vperm.slane %v268, 0
        %v1110 = vmul.f32 %v1047, %v1109
        %v1111 = vmul.f32 %v1051, %v1109
        %v1112 = vmul.f32 %v1055, %v1109
        %v1113 = vmul.f32 %v1059, %v1109
        %v1114 = vmul.f32 %v1063, %v1109
        %v1115 = vmul.f32 %v1067, %v1109
        %v1116 = vmul.f32 %v1071, %v1109
        %v1117 = vmul.f32 %v1075, %v1109
        %v1118 = vmul.f32 %v1079, %v1109
        %v1119 = vmul.f32 %v1083, %v1109
        %v1120 = vmul.f32 %v1087, %v1109
        %v1121 = vmul.f32 %v1091, %v1109
        %v1122 = vmul.f32 %v1095, %v1109
        %v1123 = vmul.f32 %v1099, %v1109
        %v1124 = vmul.f32 %v1103, %v1109
        %v1125 = vmul.f32 %v1107, %v1109
        %v1126 = vadd.f32 %v1029, %v1110
        %v1127 = vadd.f32 %v1030, %v1111
        %v1128 = vadd.f32 %v1031, %v1112
        %v1129 = vadd.f32 %v1032, %v1113
        %v1130 = vadd.f32 %v1033, %v1114
        %v1131 = vadd.f32 %v1034, %v1115
        %v1132 = vadd.f32 %v1035, %v1116
        %v1133 = vadd.f32 %v1036, %v1117
        %v1134 = vadd.f32 %v1037, %v1118
        %v1135 = vadd.f32 %v1038, %v1119
        %v1136 = vadd.f32 %v1039, %v1120
        %v1137 = vadd.f32 %v1040, %v1121
        %v1138 = vadd.f32 %v1041, %v1122
        %v1139 = vadd.f32 %v1042, %v1123
        %v1140 = vadd.f32 %v1043, %v1124
        %v1141 = vadd.f32 %v1044, %v1125
        %1142 = vset.pattern.permute.xlu0 9
        %1143 = vperm.xlu0 %1142, %v251
        %v1144 = vpop.permute.xlu0 %1143
        %1146 = vset.pattern.permute.xlu0 9
        %1147 = vperm.xlu0 %1146, %v252
        %v1148 = vpop.permute.xlu0 %1147
        %1150 = vset.pattern.permute.xlu0 9
        %1151 = vperm.xlu0 %1150, %v253
        %v1152 = vpop.permute.xlu0 %1151
        %1154 = vset.pattern.permute.xlu0 9
        %1155 = vperm.xlu0 %1154, %v254
        %v1156 = vpop.permute.xlu0 %1155
        %1158 = vset.pattern.permute.xlu0 9
        %1159 = vperm.xlu0 %1158, %v255
        %v1160 = vpop.permute.xlu0 %1159
        %1162 = vset.pattern.permute.xlu0 9
        %1163 = vperm.xlu0 %1162, %v256
        %v1164 = vpop.permute.xlu0 %1163
        %1166 = vset.pattern.permute.xlu0 9
        %1167 = vperm.xlu0 %1166, %v257
        %v1168 = vpop.permute.xlu0 %1167
        %1170 = vset.pattern.permute.xlu0 9
        %1171 = vperm.xlu0 %1170, %v258
        %v1172 = vpop.permute.xlu0 %1171
        %1174 = vset.pattern.permute.xlu0 9
        %1175 = vperm.xlu0 %1174, %v259
        %v1176 = vpop.permute.xlu0 %1175
        %1178 = vset.pattern.permute.xlu0 9
        %1179 = vperm.xlu0 %1178, %v260
        %v1180 = vpop.permute.xlu0 %1179
        %1182 = vset.pattern.permute.xlu0 9
        %1183 = vperm.xlu0 %1182, %v261
        %v1184 = vpop.permute.xlu0 %1183
        %1186 = vset.pattern.permute.xlu0 9
        %1187 = vperm.xlu0 %1186, %v262
        %v1188 = vpop.permute.xlu0 %1187
        %1190 = vset.pattern.permute.xlu0 9
        %1191 = vperm.xlu0 %1190, %v263
        %v1192 = vpop.permute.xlu0 %1191
        %1194 = vset.pattern.permute.xlu0 9
        %1195 = vperm.xlu0 %1194, %v264
        %v1196 = vpop.permute.xlu0 %1195
        %1198 = vset.pattern.permute.xlu0 9
        %1199 = vperm.xlu0 %1198, %v265
        %v1200 = vpop.permute.xlu0 %1199
        %1202 = vset.pattern.permute.xlu0 9
        %1203 = vperm.xlu0 %1202, %v266
        %v1204 = vpop.permute.xlu0 %1203
        %v1206 = vperm.slane %v268, 1
        %v1207 = vmul.f32 %v1144, %v1206
        %v1208 = vmul.f32 %v1148, %v1206
        %v1209 = vmul.f32 %v1152, %v1206
        %v1210 = vmul.f32 %v1156, %v1206
        %v1211 = vmul.f32 %v1160, %v1206
        %v1212 = vmul.f32 %v1164, %v1206
        %v1213 = vmul.f32 %v1168, %v1206
        %v1214 = vmul.f32 %v1172, %v1206
        %v1215 = vmul.f32 %v1176, %v1206
        %v1216 = vmul.f32 %v1180, %v1206
        %v1217 = vmul.f32 %v1184, %v1206
        %v1218 = vmul.f32 %v1188, %v1206
        %v1219 = vmul.f32 %v1192, %v1206
        %v1220 = vmul.f32 %v1196, %v1206
        %v1221 = vmul.f32 %v1200, %v1206
        %v1222 = vmul.f32 %v1204, %v1206
        %v1223 = vadd.f32 %v1126, %v1207
        %v1224 = vadd.f32 %v1127, %v1208
        %v1225 = vadd.f32 %v1128, %v1209
        %v1226 = vadd.f32 %v1129, %v1210
        %v1227 = vadd.f32 %v1130, %v1211
        %v1228 = vadd.f32 %v1131, %v1212
        %v1229 = vadd.f32 %v1132, %v1213
        %v1230 = vadd.f32 %v1133, %v1214
        %v1231 = vadd.f32 %v1134, %v1215
        %v1232 = vadd.f32 %v1135, %v1216
        %v1233 = vadd.f32 %v1136, %v1217
        %v1234 = vadd.f32 %v1137, %v1218
        %v1235 = vadd.f32 %v1138, %v1219
        %v1236 = vadd.f32 %v1139, %v1220
        %v1237 = vadd.f32 %v1140, %v1221
        %v1238 = vadd.f32 %v1141, %v1222
        %v1239 = vlaneseq
        %v1240 = vshrl.u32 %v1239, 7
        %v1241 = vadd.s32 %v1240, 8
        %v1242 = vadd.s32 %v1240, 16
        %v1243 = vadd.s32 %v1240, 24
        %v1244 = vadd.s32 %v1240, 32
        %v1245 = vadd.s32 %v1240, 40
        %v1246 = vadd.s32 %v1240, 48
        %v1247 = vadd.s32 %v1240, 56
        %v1248 = vadd.s32 %v1240, 64
        %v1249 = vadd.s32 %v1240, 72
        %v1250 = vadd.s32 %v1240, 80
        %v1251 = vadd.s32 %v1240, 88
        %v1252 = vadd.s32 %v1240, 96
        %v1253 = vadd.s32 %v1240, 104
        %v1254 = vadd.s32 %v1240, 112
        %v1255 = vadd.s32 %v1240, 120
        %s1256 = smul.u32 %s26, 128
        %v1257 = vstv %s1256
        %v1258 = vadd.s32 %v1240, %v1257
        %v1259 = vadd.s32 %v1241, %v1257
        %v1260 = vadd.s32 %v1242, %v1257
        %v1261 = vadd.s32 %v1243, %v1257
        %v1262 = vadd.s32 %v1244, %v1257
        %v1263 = vadd.s32 %v1245, %v1257
        %v1264 = vadd.s32 %v1246, %v1257
        %v1265 = vadd.s32 %v1247, %v1257
        %v1266 = vadd.s32 %v1248, %v1257
        %v1267 = vadd.s32 %v1249, %v1257
        %v1268 = vadd.s32 %v1250, %v1257
        %v1269 = vadd.s32 %v1251, %v1257
        %v1270 = vadd.s32 %v1252, %v1257
        %v1271 = vadd.s32 %v1253, %v1257
        %v1272 = vadd.s32 %v1254, %v1257
        %v1273 = vadd.s32 %v1255, %v1257
        %vm1274 = vcmp.lt.s32.totalorder %v1258, 408
        %vm1275 = vcmp.lt.s32.totalorder %v1259, 408
        %vm1276 = vcmp.lt.s32.totalorder %v1260, 408
        %vm1277 = vcmp.lt.s32.totalorder %v1261, 408
        %vm1278 = vcmp.lt.s32.totalorder %v1262, 408
        %vm1279 = vcmp.lt.s32.totalorder %v1263, 408
        %vm1280 = vcmp.lt.s32.totalorder %v1264, 408
        %vm1281 = vcmp.lt.s32.totalorder %v1265, 408
        %vm1282 = vcmp.lt.s32.totalorder %v1266, 408
        %vm1283 = vcmp.lt.s32.totalorder %v1267, 408
        %vm1284 = vcmp.lt.s32.totalorder %v1268, 408
        %vm1285 = vcmp.lt.s32.totalorder %v1269, 408
        %vm1286 = vcmp.lt.s32.totalorder %v1270, 408
        %vm1287 = vcmp.lt.s32.totalorder %v1271, 408
        %vm1288 = vcmp.lt.s32.totalorder %v1272, 408
        %vm1289 = vcmp.lt.s32.totalorder %v1273, 408
        %v1290 = vsel %vm1274, 1, 0
        %v1291 = vsel %vm1275, 1, 0
        %v1292 = vsel %vm1276, 1, 0
        %v1293 = vsel %vm1277, 1, 0
        %v1294 = vsel %vm1278, 1, 0
        %v1295 = vsel %vm1279, 1, 0
        %v1296 = vsel %vm1280, 1, 0
        %v1297 = vsel %vm1281, 1, 0
        %v1298 = vsel %vm1282, 1, 0
        %v1299 = vsel %vm1283, 1, 0
        %v1300 = vsel %vm1284, 1, 0
        %v1301 = vsel %vm1285, 1, 0
        %v1302 = vsel %vm1286, 1, 0
        %v1303 = vsel %vm1287, 1, 0
        %v1304 = vsel %vm1288, 1, 0
        %v1305 = vsel %vm1289, 1, 0
        %vm1306 = vcmp.eq.s32.totalorder %v1290, 1
        %vm1307 = vcmp.eq.s32.totalorder %v1291, 1
        %vm1308 = vcmp.eq.s32.totalorder %v1292, 1
        %vm1309 = vcmp.eq.s32.totalorder %v1293, 1
        %vm1310 = vcmp.eq.s32.totalorder %v1294, 1
        %vm1311 = vcmp.eq.s32.totalorder %v1295, 1
        %vm1312 = vcmp.eq.s32.totalorder %v1296, 1
        %vm1313 = vcmp.eq.s32.totalorder %v1297, 1
        %vm1314 = vcmp.eq.s32.totalorder %v1298, 1
        %vm1315 = vcmp.eq.s32.totalorder %v1299, 1
        %vm1316 = vcmp.eq.s32.totalorder %v1300, 1
        %vm1317 = vcmp.eq.s32.totalorder %v1301, 1
        %vm1318 = vcmp.eq.s32.totalorder %v1302, 1
        %vm1319 = vcmp.eq.s32.totalorder %v1303, 1
        %vm1320 = vcmp.eq.s32.totalorder %v1304, 1
        %vm1321 = vcmp.eq.s32.totalorder %v1305, 1
        %v1322 = vsel %vm1306, %v1223, 0.0
        %v1323 = vsel %vm1307, %v1224, 0.0
        %v1324 = vsel %vm1308, %v1225, 0.0
        %v1325 = vsel %vm1309, %v1226, 0.0
        %v1326 = vsel %vm1310, %v1227, 0.0
        %v1327 = vsel %vm1311, %v1228, 0.0
        %v1328 = vsel %vm1312, %v1229, 0.0
        %v1329 = vsel %vm1313, %v1230, 0.0
        %v1330 = vsel %vm1314, %v1231, 0.0
        %v1331 = vsel %vm1315, %v1232, 0.0
        %v1332 = vsel %vm1316, %v1233, 0.0
        %v1333 = vsel %vm1317, %v1234, 0.0
        %v1334 = vsel %vm1318, %v1235, 0.0
        %v1335 = vsel %vm1319, %v1236, 0.0
        %v1336 = vsel %vm1320, %v1237, 0.0
        %v1337 = vsel %vm1321, %v1238, 0.0
        %v1338 = vld [vmem:[%s201] sm:$0x1]
        %vm1339 = vcmask 523264
        %v1340 = vsel %vm1339, %v1322, 0.0
        %v1341 = vsel %vm1339, %v1323, 0.0
        %v1342 = vadd.f32 %v1340, %v1341
        %v1343 = vsel %vm1339, %v1324, 0.0
        %v1344 = vadd.f32 %v1342, %v1343
        %v1345 = vsel %vm1339, %v1325, 0.0
        %v1346 = vadd.f32 %v1344, %v1345
        %v1347 = vsel %vm1339, %v1326, 0.0
        %v1348 = vadd.f32 %v1346, %v1347
        %v1349 = vsel %vm1339, %v1327, 0.0
        %v1350 = vadd.f32 %v1348, %v1349
        %v1351 = vsel %vm1339, %v1328, 0.0
        %v1352 = vadd.f32 %v1350, %v1351
        %v1353 = vsel %vm1339, %v1329, 0.0
        %v1354 = vadd.f32 %v1352, %v1353
        %v1355 = vsel %vm1339, %v1330, 0.0
        %v1356 = vadd.f32 %v1354, %v1355
        %v1357 = vsel %vm1339, %v1331, 0.0
        %v1358 = vadd.f32 %v1356, %v1357
        %v1359 = vsel %vm1339, %v1332, 0.0
        %v1360 = vadd.f32 %v1358, %v1359
        %v1361 = vsel %vm1339, %v1333, 0.0
        %v1362 = vadd.f32 %v1360, %v1361
        %v1363 = vsel %vm1339, %v1334, 0.0
        %v1364 = vadd.f32 %v1362, %v1363
        %v1365 = vsel %vm1339, %v1335, 0.0
        %v1366 = vadd.f32 %v1364, %v1365
        %v1367 = vsel %vm1339, %v1336, 0.0
        %v1368 = vadd.f32 %v1366, %v1367
        %v1369 = vsel %vm1339, %v1337, 0.0
        %v1370 = vadd.f32 %v1368, %v1369
        %v1371 = vrot.slane %v1370, 4
        %v1372 = vadd.f32 %v1370, %v1371
        %v1373 = vrot.slane %v1372, 2
        %v1374 = vadd.f32 %v1372, %v1373
        %v1375 = vrot.slane %v1374, 1
        %v1376 = vadd.f32 %v1374, %v1375
        %v1377 = vadd.f32 %v1338, %v1376
        %vm1378 = vcmask 516096
        %1379 = vst.msk [vmem:[%s201] sm:$0x1] %vm1378, %v1377
        %v1380 = vld [vmem:[%s207] sm:$0x1]
        %v1381 = vmul.f32 %v1322, %v1322
        %v1382 = vmul.f32 %v1323, %v1323
        %v1383 = vmul.f32 %v1324, %v1324
        %v1384 = vmul.f32 %v1325, %v1325
        %v1385 = vmul.f32 %v1326, %v1326
        %v1386 = vmul.f32 %v1327, %v1327
        %v1387 = vmul.f32 %v1328, %v1328
        %v1388 = vmul.f32 %v1329, %v1329
        %v1389 = vmul.f32 %v1330, %v1330
        %v1390 = vmul.f32 %v1331, %v1331
        %v1391 = vmul.f32 %v1332, %v1332
        %v1392 = vmul.f32 %v1333, %v1333
        %v1393 = vmul.f32 %v1334, %v1334
        %v1394 = vmul.f32 %v1335, %v1335
        %v1395 = vmul.f32 %v1336, %v1336
        %v1396 = vmul.f32 %v1337, %v1337
        %v1397 = vsel %vm1339, %v1381, 0.0
        %v1398 = vsel %vm1339, %v1382, 0.0
        %v1399 = vadd.f32 %v1397, %v1398
        %v1400 = vsel %vm1339, %v1383, 0.0
        %v1401 = vadd.f32 %v1399, %v1400
        %v1402 = vsel %vm1339, %v1384, 0.0
        %v1403 = vadd.f32 %v1401, %v1402
        %v1404 = vsel %vm1339, %v1385, 0.0
        %v1405 = vadd.f32 %v1403, %v1404
        %v1406 = vsel %vm1339, %v1386, 0.0
        %v1407 = vadd.f32 %v1405, %v1406
        %v1408 = vsel %vm1339, %v1387, 0.0
        %v1409 = vadd.f32 %v1407, %v1408
        %v1410 = vsel %vm1339, %v1388, 0.0
        %v1411 = vadd.f32 %v1409, %v1410
        %v1412 = vsel %vm1339, %v1389, 0.0
        %v1413 = vadd.f32 %v1411, %v1412
        %v1414 = vsel %vm1339, %v1390, 0.0
        %v1415 = vadd.f32 %v1413, %v1414
        %v1416 = vsel %vm1339, %v1391, 0.0
        %v1417 = vadd.f32 %v1415, %v1416
        %v1418 = vsel %vm1339, %v1392, 0.0
        %v1419 = vadd.f32 %v1417, %v1418
        %v1420 = vsel %vm1339, %v1393, 0.0
        %v1421 = vadd.f32 %v1419, %v1420
        %v1422 = vsel %vm1339, %v1394, 0.0
        %v1423 = vadd.f32 %v1421, %v1422
        %v1424 = vsel %vm1339, %v1395, 0.0
        %v1425 = vadd.f32 %v1423, %v1424
        %v1426 = vsel %vm1339, %v1396, 0.0
        %v1427 = vadd.f32 %v1425, %v1426
        %v1428 = vrot.slane %v1427, 4
        %v1429 = vadd.f32 %v1427, %v1428
        %v1430 = vrot.slane %v1429, 2
        %v1431 = vadd.f32 %v1429, %v1430
        %v1432 = vrot.slane %v1431, 1
        %v1433 = vadd.f32 %v1431, %v1432
        %v1434 = vadd.f32 %v1380, %v1433
        %1435 = vst.msk [vmem:[%s207] sm:$0x1] %vm1378, %v1434
        %s1436 = sand.u32 %s90, 1
        %s1437 = scalar_lea.sflag [#allocation3], %s1436
        %s1438 = sand.u32 %s90, 1
        %s1439 = scalar_lea.vmem [#allocation2], %s1438
        %s1440 = sand.u32 %s116, 1
        %s1441 = scalar_lea.sflag [#allocation5], %s1440
        %s1442 = sand.u32 %s116, 1
        %s1443 = scalar_lea.vmem [#allocation4], %s1442
        // Predicated region
        $region33: #{tpu_custom_call.1} parent=27 // pred_check
          %p1444 = pneg %p100
        $region34: #{tpu_custom_call.1} parent=27 // pred_check_branch
          %1446 = sbr.rel (%p1444) target = $region36
        $region35: #{tpu_custom_call.1} parent=27 // pred_region
          %1448 = vsyncadd %s1437, 0
          %s1449 = scalar_lea.hbm %s2, %s25
          %s1451 = sshll.u32 %s1439, 4
          %s1452 = int_to_ptr.vmem [resolvable:$true] %s1451
          %s1453 = sshll.u32 %s1449, 4
          %s1454 = int_to_ptr.hbm [resolvable:$true] %s1453
          %1456 = dma.vmem_to_hbm [thread:$0]  %s1452, 16, %s1454, %s1437
        $region36: #{tpu_custom_call.1} parent=27 // pred_fallthru
          _
        // Predicated region
        $region37: #{tpu_custom_call.1} parent=27 // pred_check
          %p1457 = pneg %p126
        $region38: #{tpu_custom_call.1} parent=27 // pred_check_branch
          %1459 = sbr.rel (%p1457) target = $region40
        $region39: #{tpu_custom_call.1} parent=27 // pred_region
          %1461 = vsyncadd %s1441, 0
          %s1462 = scalar_lea.hbm %s3, %s25
          %s1464 = sshll.u32 %s1443, 4
          %s1465 = int_to_ptr.vmem [resolvable:$true] %s1464
          %s1466 = sshll.u32 %s1462, 4
          %s1467 = int_to_ptr.hbm [resolvable:$true] %s1466
          %1469 = dma.vmem_to_hbm [thread:$0]  %s1465, 16, %s1467, %s1441
        $region40: #{tpu_custom_call.1} parent=27 // pred_fallthru
          _
      $region28: #{tpu_custom_call.1} parent=5 // pred_fallthru
        _
      %p1470 = scmp.le.s32.totalorder 2, %s16
      // Predicated region
      $region41: #{tpu_custom_call.1} parent=5 // pred_check
        %p1471 = pneg %p1470
      $region42: #{tpu_custom_call.1} parent=5 // pred_check_branch
        %1473 = sbr.rel (%p1471) target = $region44
      $region43: #{tpu_custom_call.1} parent=5 // pred_region
        %s1474 = ssub.s32 %s16, 2
        // Predicated region
        $region45: #{tpu_custom_call.1} parent=43 // pred_check
          %p1475 = pneg %p106
        $region46: #{tpu_custom_call.1} parent=43 // pred_check_branch
          %1477 = sbr.rel (%p1475) target = $region48
        $region47: #{tpu_custom_call.1} parent=43 // pred_region
          %s1478 = sand.u32 %s91, 1
          %s1479 = scalar_lea.sflag [#allocation3], %s1478
          %s1480 = sand.u32 %s91, 1
          %s1481 = scalar_lea.vmem [#allocation2], %s1480
          %1483 = dma.done %s1479, 16
        $region48: #{tpu_custom_call.1} parent=43 // pred_fallthru
          _
        // Predicated region
        $region49: #{tpu_custom_call.1} parent=43 // pred_check
          %p1484 = pneg %p132
        $region50: #{tpu_custom_call.1} parent=43 // pred_check_branch
          %1486 = sbr.rel (%p1484) target = $region52
        $region51: #{tpu_custom_call.1} parent=43 // pred_region
          %s1487 = sand.u32 %s117, 1
          %s1488 = scalar_lea.sflag [#allocation5], %s1487
          %s1489 = sand.u32 %s117, 1
          %s1490 = scalar_lea.vmem [#allocation4], %s1489
          %1492 = dma.done %s1488, 16
        $region52: #{tpu_custom_call.1} parent=43 // pred_fallthru
          _
      $region44: #{tpu_custom_call.1} parent=5 // pred_fallthru
        _
    $region6: #{tpu_custom_call.1} parent=1 // loop_footer
      %s20 = sadd.s32 1, %s16
    $region7: #{tpu_custom_call.1} parent=1 // loop_footer_branch
      %15 = sbr.rel target = $region3
    $region8: #{tpu_custom_call.1} parent=1 // loop_exit
      _
    %1493 = vsyncpa [#allocation3], 1
    %s1494 = scalar_lea.sflag [#allocation3], 1
    %1495 = vsyncpa %s1494, 1
    %1496 = vsyncpa [#allocation5], 1
    %s1497 = scalar_lea.sflag [#allocation5], 1
    %1498 = vsyncpa %s1497, 1

</llo_original>
